<compile_context>
chip_gen: v5e
topology: v5e:2x2
jax: 0.10.0
libtpu: 0.0.40
codegen_flags: <defaults>
</compile_context>

<pallas_src>
import functools

import jax
import jax.numpy as jnp
from jax import lax
from jax.experimental import pallas as pl
from jax.experimental.pallas import tpu as pltpu


def _round_up(x, m):
    return ((x + m - 1) // m) * m


def _pick_batch_tile(B, target=64):
    """Largest batch tile <= target that is a multiple of 8 and divides B."""
    if B <= target or B % 8 != 0:
        return B
    t = (target // 8) * 8
    while t >= 8:
        if B % t == 0:
            return t
        t -= 8
    return B


# ----------------------------------------------------------------------------
# Fused bidirectional LSTM kernel.
# Gate order / math matches torch.nn.LSTM: i, f, g, o;
#   c_t = f*c_{t-1} + i*g ; h_t = o*tanh(c_t)
# grid = (direction, batch_tile); time handled by in-kernel fori_loops.
# ----------------------------------------------------------------------------
def _bilstm_kernel(x_ref, wih_ref, whh_ref, b_ref, out_ref, gx_sc, h_sc, c_sc):
    L, Bt, _ = x_ref.shape
    Hp = h_sc.shape[-1]
    d = pl.program_id(0)                    # 0 = forward, 1 = backward

    # Hoisted bias broadcast (JAX does not CSE broadcasts inside loops).
    bb = jnp.broadcast_to(b_ref[0], (Bt, 4 * Hp))

    # Phase 1: input projection hoisted out of the recurrence. These matmuls
    # are independent across t, so the MXU pipelines them back-to-back and the
    # serial loop below keeps only the unavoidable h @ W_hh.
    def proj(t, carry):
        gx_sc[t] = (jnp.dot(x_ref[t], wih_ref[0],
                            preferred_element_type=jnp.float32) + bb)
        return carry

    lax.fori_loop(0, L, proj, 0)

    h_sc[...] = jnp.zeros_like(h_sc)
    c_sc[...] = jnp.zeros_like(c_sc)

    # Phase 2: the recurrence. Each gate slice is 128-lane aligned (Hp % 128 == 0),
    # so slices and the (Bt, Hp) store are lane-dense (no masked vst / XLU shuffles).
    def step(t, carry):
        t_idx = jnp.where(d == 0, t, L - 1 - t)         # fwd / bwd time index
        gates = gx_sc[t_idx] + jnp.dot(
            h_sc[...], whh_ref[0], preferred_element_type=jnp.float32)
        i = jax.nn.sigmoid(gates[:, 0 * Hp:1 * Hp])
        f = jax.nn.sigmoid(gates[:, 1 * Hp:2 * Hp])
        g = jnp.tanh(gates[:, 2 * Hp:3 * Hp])
        o = jax.nn.sigmoid(gates[:, 3 * Hp:4 * Hp])
        c_new = f * c_sc[...] + i * g
        h_new = o * jnp.tanh(c_new)
        c_sc[...] = c_new
        h_sc[...] = h_new
        out_ref[0, t_idx] = h_new
        return carry

    lax.fori_loop(0, L, step, 0)


def bilstm(x_tbe, w_ih, w_hh, bias, Hp, *, b_tile=None):
    """x_tbe: (L, B, E) time-major. Returns stacked (2, L, B, Hp) [fwd, bwd]."""
    L, B, E = x_tbe.shape
    G4 = 4 * Hp
    tb = _pick_batch_tile(B) if b_tile is None else b_tile
    nb = B // tb

    cost = pl.CostEstimate(
        flops=2 * 2 * L * B * (E + Hp) * G4,
        transcendentals=2 * L * B * 5 * Hp,
        bytes_accessed=4 * (2 * L * B * E + 2 * (E + Hp + 1) * G4 + 2 * L * B * Hp),
    )
    return pl.pallas_call(
        _bilstm_kernel,
        out_shape=jax.ShapeDtypeStruct((2, L, B, Hp), jnp.float32),
        grid_spec=pltpu.PrefetchScalarGridSpec(
            num_scalar_prefetch=0,
            grid=(2, nb),
            in_specs=[
                pl.BlockSpec((L, tb, E), lambda d, bi: (0, bi, 0)),
                pl.BlockSpec((1, E, G4), lambda d, bi: (d, 0, 0)),
                pl.BlockSpec((1, Hp, G4), lambda d, bi: (d, 0, 0)),
                pl.BlockSpec((1, 1, G4), lambda d, bi: (d, 0, 0)),
            ],
            out_specs=pl.BlockSpec((1, L, tb, Hp), lambda d, bi: (d, 0, bi, 0)),
            scratch_shapes=[
                pltpu.VMEM((L, tb, G4), jnp.float32),   # hoisted x-projection
                pltpu.VMEM((tb, Hp), jnp.float32),      # h state
                pltpu.VMEM((tb, Hp), jnp.float32),      # c state
            ],
        ),
        compiler_params=pltpu.CompilerParams(
            dimension_semantics=("parallel", "parallel"),
            vmem_limit_bytes=32 * 1024 * 1024,
        ),
        cost_estimate=cost,
    )(x_tbe, w_ih, w_hh, bias)


# ----------------------------------------------------------------------------
# Head kernel: z_t = tanh(h_f W1 + h_b W2 + emb W3 + b); max-pool over time is
# fused into the loop; then fc + log_softmax. No concat/transpose materialized.
# ----------------------------------------------------------------------------
def _head_kernel(h_ref, emb_ref, whf_ref, whb_ref, we_ref, bw_ref,
                 fc_ref, bfc_ref, out_ref):
    _, L, Bt, _ = h_ref.shape
    D = whf_ref.shape[-1]
    bwb = jnp.broadcast_to(bw_ref[...], (Bt, D))        # hoisted broadcast

    def body(t, pooled):
        z = (jnp.dot(h_ref[0, t], whf_ref[...], preferred_element_type=jnp.float32)
             + jnp.dot(h_ref[1, t], whb_ref[...], preferred_element_type=jnp.float32)
             + jnp.dot(emb_ref[t], we_ref[...], preferred_element_type=jnp.float32)
             + bwb)
        return jnp.maximum(pooled, jnp.tanh(z))

    pooled = lax.fori_loop(0, L, body,
                           jnp.full((Bt, D), -jnp.inf, jnp.float32))
    logits = jnp.dot(pooled, fc_ref[...],
                     preferred_element_type=jnp.float32) + bfc_ref[...]
    m = jnp.max(logits, axis=1, keepdims=True)
    lse = m + jnp.log(jnp.sum(jnp.exp(logits - m), axis=1, keepdims=True))
    out_ref[...] = logits - lse


def rcnn_head(lstm_out, emb_tbe, W_hf, W_hb, W_e, b_W, fc_t, b_fc, n_class,
              *, b_tile=None):
    _, L, B, Hp = lstm_out.shape
    E = emb_tbe.shape[-1]
    D = W_hf.shape[-1]
    tb = _pick_batch_tile(B) if b_tile is None else b_tile
    nb = B // tb

    cost = pl.CostEstimate(
        flops=2 * L * B * (2 * Hp + E) * D + 2 * B * D * n_class,
        transcendentals=L * B * D + B * n_class,
        bytes_accessed=4 * (2 * L * B * Hp + L * B * E + (2 * Hp + E) * D
                            + D * n_class + B * n_class),
    )
    return pl.pallas_call(
        _head_kernel,
        out_shape=jax.ShapeDtypeStruct((B, n_class), jnp.float32),
        grid_spec=pltpu.PrefetchScalarGridSpec(
            num_scalar_prefetch=0,
            grid=(nb,),
            in_specs=[
                pl.BlockSpec((2, L, tb, Hp), lambda bi: (0, 0, bi, 0)),
                pl.BlockSpec((L, tb, E), lambda bi: (0, bi, 0)),
                pl.BlockSpec((Hp, D), lambda bi: (0, 0)),
                pl.BlockSpec((Hp, D), lambda bi: (0, 0)),
                pl.BlockSpec((E, D), lambda bi: (0, 0)),
                pl.BlockSpec((1, D), lambda bi: (0, 0)),
                pl.BlockSpec((D, n_class), lambda bi: (0, 0)),
                pl.BlockSpec((1, n_class), lambda bi: (0, 0)),
            ],
            out_specs=pl.BlockSpec((tb, n_class), lambda bi: (bi, 0)),
        ),
        compiler_params=pltpu.CompilerParams(
            dimension_semantics=("parallel",),
            vmem_limit_bytes=32 * 1024 * 1024,
        ),
        cost_estimate=cost,
    )(lstm_out, emb_tbe, W_hf, W_hb, W_e, b_W, fc_t, b_fc)


# ----------------------------------------------------------------------------
# Full RCNN forward (wrapper glue: only the embedding gather is plain JAX).
# ----------------------------------------------------------------------------
def rcnn_forward(in_ids, kp, *, Hp, n_class):
    # Gather directly into time-major layout -> no activation transpose.
    x_tbe = jnp.take(kp['emb'], in_ids.T, axis=0)               # (L, B, E)
    lstm_out = bilstm(x_tbe, kp['w_ih'], kp['w_hh'], kp['b'], Hp)   # (2, L, B, Hp)
    return rcnn_head(lstm_out, x_tbe, kp['W_hf'], kp['W_hb'], kp['W_e'],
                     kp['b_W'], kp['fc_t'], kp['b_fc'], n_class)     # (B, C)


# ----------------------------------------------------------------------------
# Parameters: raw (PyTorch-layout) params + one-time prep into kernel layout
# (gate-wise lane padding H -> Hp, weight transposes, direction stacking,
#  W split into h_fwd / h_bwd / emb blocks).
# ----------------------------------------------------------------------------
def init_raw_params(key, *, vocab, E, H, D, C):
    ks = jax.random.split(key, 13)
    u = lambda k, shape, s: jax.random.uniform(k, shape, jnp.float32, -s, s)
    sH = 1.0 / (H ** 0.5)
    sW = 1.0 / ((E + 2 * H) ** 0.5)
    sF = 1.0 / (D ** 0.5)
    emb = (jax.random.normal(ks[0], (vocab, E), jnp.float32) * 0.1).at[0].set(0.0)
    return {
        'emb': emb,                                           # padding_idx=0
        'w_ih_f': u(ks[1], (4 * H, E), sH), 'w_hh_f': u(ks[2], (4 * H, H), sH),
        'b_ih_f': u(ks[3], (4 * H,), sH),   'b_hh_f': u(ks[4], (4 * H,), sH),
        'w_ih_b': u(ks[5], (4 * H, E), sH), 'w_hh_b': u(ks[6], (4 * H, H), sH),
        'b_ih_b': u(ks[7], (4 * H,), sH),   'b_hh_b': u(ks[8], (4 * H,), sH),
        'W': u(ks[9], (D, E + 2 * H), sW),  'b_W': u(ks[10], (D,), sW),
        'fc': u(ks[11], (C, D), sF),        'b_fc': u(ks[12], (C,), sF),
    }


def prepare_kernel_params(raw, H):
    Hp = _round_up(H, 128)          # each gate on its own 128-lane boundary

    def pad_gate_cols(w_t):         # (in, 4H) -> (in, 4Hp), gate g at col g*Hp
        parts = [jnp.pad(w_t[:, g * H:(g + 1) * H], ((0, 0), (0, Hp - H)))
                 for g in range(4)]
        return jnp.concatenate(parts, axis=1)

    def prep_ih(w):                 # torch (4H, E) -> (E, 4Hp)
        return pad_gate_cols(w.T)

    def prep_hh(w):                 # torch (4H, H) -> (Hp, 4Hp), zero pad rows
        return jnp.pad(pad_gate_cols(w.T), ((0, Hp - H), (0, 0)))

    def prep_b(b_ih, b_hh):         # -> (1, 4Hp)
        return pad_gate_cols((b_ih + b_hh).reshape(1, 4 * H))

    W = raw['W']                    # (D, 2H+E): [h_fwd | h_bwd | emb] columns
    kp = {
        'emb': raw['emb'],
        'w_ih': jnp.stack([prep_ih(raw['w_ih_f']), prep_ih(raw['w_ih_b'])]),
        'w_hh': jnp.stack([prep_hh(raw['w_hh_f']), prep_hh(raw['w_hh_b'])]),
        'b': jnp.stack([prep_b(raw['b_ih_f'], raw['b_hh_f']),
                        prep_b(raw['b_ih_b'], raw['b_hh_b'])]),
        'W_hf': jnp.pad(W[:, :H].T, ((0, Hp - H), (0, 0))),          # (Hp, D)
        'W_hb': jnp.pad(W[:, H:2 * H].T, ((0, Hp - H), (0, 0))),     # (Hp, D)
        'W_e': W[:, 2 * H:].T,                                       # (E, D)
        'b_W': raw['b_W'].reshape(1, -1),
        'fc_t': raw['fc'].T,                                         # (D, C)
        'b_fc': raw['b_fc'].reshape(1, -1),
    }
    return kp, Hp


# ----------------------------------------------------------------------------
# Pure-JAX reference (mirrors the PyTorch module) for a correctness check.
# ----------------------------------------------------------------------------
def rcnn_reference(in_ids, raw):
    x = jnp.take(raw['emb'], in_ids, axis=0)                  # (B, L, E)
    B = x.shape[0]
    H = raw['w_hh_f'].shape[1]

    def run_dir(xs, w_ih, w_hh, b):
        def step(carry, x_t):
            h, c = carry
            g = x_t @ w_ih.T + h @ w_hh.T + b
            i = jax.nn.sigmoid(g[:, :H])
            f = jax.nn.sigmoid(g[:, H:2 * H])
            gg = jnp.tanh(g[:, 2 * H:3 * H])
            o = jax.nn.sigmoid(g[:, 3 * H:])
            c = f * c + i * gg
            h = o * jnp.tanh(c)
            return (h, c), h
        h0 = jnp.zeros((B, H), jnp.float32)
        _, hs = lax.scan(step, (h0, jnp.zeros_like(h0)), xs)
        return hs                                              # (L, B, H)

    xs = jnp.transpose(x, (1, 0, 2))
    hf = run_dir(xs, raw['w_ih_f'], raw['w_hh_f'], raw['b_ih_f'] + raw['b_hh_f'])
    hb = run_dir(xs[::-1], raw['w_ih_b'], raw['w_hh_b'],
                 raw['b_ih_b'] + raw['b_hh_b'])[::-1]
    out = jnp.transpose(jnp.concatenate([hf, hb], axis=-1), (1, 0, 2))  # (B,L,2H)
    feat = jnp.concatenate([out, x], axis=-1)
    z = jnp.tanh(feat @ raw['W'].T + raw['b_W'])
    pooled = jnp.max(z, axis=1)
    logits = pooled @ raw['fc'].T + raw['b_fc']
    return jax.nn.log_softmax(logits, axis=1)


if __name__ == "__main__":
    # Small config consistent with the module (kwargs-overridable in PyTorch).
    B, L = 2, 8
    vocab, E, H, D, C = 50, 32, 16, 16, 4

    key = jax.random.PRNGKey(0)
    k_ids, k_par = jax.random.split(key)
    in_ids = jax.random.randint(k_ids, (B, L), 0, vocab, dtype=jnp.int32)

    raw = init_raw_params(k_par, vocab=vocab, E=E, H=H, D=D, C=C)
    kp, Hp = prepare_kernel_params(raw, H)

    fwd = jax.jit(functools.partial(rcnn_forward, Hp=Hp, n_class=C))
    out = jax.block_until_ready(fwd(in_ids, kp))

    assert out.shape == (B, C), out.shape
    # log_softmax rows should sum (in prob space) to ~1
    assert jnp.allclose(jnp.sum(jnp.exp(out), axis=1), 1.0, atol=1e-4)

    with jax.default_matmul_precision("highest"):
        ref = jax.block_until_ready(jax.jit(rcnn_reference)(in_ids, raw))
    assert jnp.allclose(out, ref, atol=2e-3, rtol=2e-3), \
        float(jnp.max(jnp.abs(out - ref)))

    print("KERNEL_OK")
</pallas_src>

<mosaic_0001>
module attributes {stable_mosaic.version = 11 : i64} {
  func.func @_head_kernel(%arg0: i32, %arg1: memref<2x8x2x128xf32, #tpu.memory_space<vmem>>, %arg2: memref<8x2x32xf32, #tpu.memory_space<vmem>>, %arg3: memref<128x16xf32, #tpu.memory_space<vmem>>, %arg4: memref<128x16xf32, #tpu.memory_space<vmem>>, %arg5: memref<32x16xf32, #tpu.memory_space<vmem>>, %arg6: memref<1x16xf32, #tpu.memory_space<vmem>>, %arg7: memref<16x4xf32, #tpu.memory_space<vmem>>, %arg8: memref<1x4xf32, #tpu.memory_space<vmem>>, %arg9: memref<2x4xf32, #tpu.memory_space<vmem>>) attributes {dimension_semantics = [#tpu.dimension_semantics<parallel>], iteration_bounds = array<i64: 1>, scalar_prefetch = 0 : i64, scratch_operands = 0 : i64, tpu.core_type = #tpu.core_type<tc>, window_params = [{transform_indices = @transform_0, window_bounds = array<i64: 2, 8, 2, 128>}, {transform_indices = @transform_1, window_bounds = array<i64: 8, 2, 32>}, {pipeline_mode = #tpu.pipeline_mode<synchronous>, transform_indices = @transform_2, window_bounds = array<i64: 128, 16>}, {pipeline_mode = #tpu.pipeline_mode<synchronous>, transform_indices = @transform_3, window_bounds = array<i64: 128, 16>}, {pipeline_mode = #tpu.pipeline_mode<synchronous>, transform_indices = @transform_4, window_bounds = array<i64: 32, 16>}, {pipeline_mode = #tpu.pipeline_mode<synchronous>, transform_indices = @transform_5, window_bounds = array<i64: 1, 16>}, {pipeline_mode = #tpu.pipeline_mode<synchronous>, transform_indices = @transform_6, window_bounds = array<i64: 16, 4>}, {pipeline_mode = #tpu.pipeline_mode<synchronous>, transform_indices = @transform_7, window_bounds = array<i64: 1, 4>}, {transform_indices = @transform_8, window_bounds = array<i64: 2, 4>}]} {
    %c0 = arith.constant 0 : index
    %c0_0 = arith.constant 0 : index
    %0 = vector.load %arg6[%c0, %c0_0] : memref<1x16xf32, #tpu.memory_space<vmem>>, vector<1x16xf32>
    %1 = vector.shape_cast %0 : vector<1x16xf32> to vector<1x16xf32>
    %2 = vector.broadcast %1 : vector<1x16xf32> to vector<2x16xf32>
    %cst = arith.constant 0xFF800000 : f32
    %3 = vector.broadcast %cst : f32 to vector<2x16xf32>
    %c0_i32 = arith.constant 0 : i32
    %c8_i32 = arith.constant 8 : i32
    %4 = arith.addi %c0_i32, %c8_i32 : i32
    %c1_i32 = arith.constant 1 : i32
    %5 = scf.for %arg10 = %c0_i32 to %4 step %c1_i32 iter_args(%arg11 = %3) -> (vector<2x16xf32>)  : i32 {
      %c0_11 = arith.constant 0 : index
      %23 = arith.index_cast %arg10 : i32 to index
      %c0_12 = arith.constant 0 : index
      %c0_13 = arith.constant 0 : index
      %24 = vector.load %arg1[%c0_11, %23, %c0_12, %c0_13] : memref<2x8x2x128xf32, #tpu.memory_space<vmem>>, vector<1x1x2x128xf32>
      %25 = vector.shape_cast %24 : vector<1x1x2x128xf32> to vector<2x128xf32>
      %c0_14 = arith.constant 0 : index
      %c0_15 = arith.constant 0 : index
      %26 = vector.load %arg3[%c0_14, %c0_15] : memref<128x16xf32, #tpu.memory_space<vmem>>, vector<128x16xf32>
      %cst_16 = arith.constant dense<0.000000e+00> : vector<2x16xf32>
      %27 = tpu.matmul %25, %26, %cst_16 {dimension_numbers = #tpu.dot_dimension_numbers<[1], [0], [0], [1], [0, 0, 1, 1], [], []>} : vector<2x128xf32>, vector<128x16xf32>, vector<2x16xf32> -> vector<2x16xf32>
      %c1 = arith.constant 1 : index
      %28 = arith.index_cast %arg10 : i32 to index
      %c0_17 = arith.constant 0 : index
      %c0_18 = arith.constant 0 : index
      %29 = vector.load %arg1[%c1, %28, %c0_17, %c0_18] : memref<2x8x2x128xf32, #tpu.memory_space<vmem>>, vector<1x1x2x128xf32>
      %30 = vector.shape_cast %29 : vector<1x1x2x128xf32> to vector<2x128xf32>
      %c0_19 = arith.constant 0 : index
      %c0_20 = arith.constant 0 : index
      %31 = vector.load %arg4[%c0_19, %c0_20] : memref<128x16xf32, #tpu.memory_space<vmem>>, vector<128x16xf32>
      %cst_21 = arith.constant dense<0.000000e+00> : vector<2x16xf32>
      %32 = tpu.matmul %30, %31, %cst_21 {dimension_numbers = #tpu.dot_dimension_numbers<[1], [0], [0], [1], [0, 0, 1, 1], [], []>} : vector<2x128xf32>, vector<128x16xf32>, vector<2x16xf32> -> vector<2x16xf32>
      %33 = arith.addf %27, %32 : vector<2x16xf32>
      %34 = arith.index_cast %arg10 : i32 to index
      %c0_22 = arith.constant 0 : index
      %c0_23 = arith.constant 0 : index
      %35 = vector.load %arg2[%34, %c0_22, %c0_23] : memref<8x2x32xf32, #tpu.memory_space<vmem>>, vector<1x2x32xf32>
      %36 = vector.shape_cast %35 : vector<1x2x32xf32> to vector<2x32xf32>
      %c0_24 = arith.constant 0 : index
      %c0_25 = arith.constant 0 : index
      %37 = vector.load %arg5[%c0_24, %c0_25] : memref<32x16xf32, #tpu.memory_space<vmem>>, vector<32x16xf32>
      %cst_26 = arith.constant dense<0.000000e+00> : vector<2x16xf32>
      %38 = tpu.matmul %36, %37, %cst_26 {dimension_numbers = #tpu.dot_dimension_numbers<[1], [0], [0], [1], [0, 0, 1, 1], [], []>} : vector<2x32xf32>, vector<32x16xf32>, vector<2x16xf32> -> vector<2x16xf32>
      %39 = arith.addf %33, %38 : vector<2x16xf32>
      %40 = arith.addf %39, %2 : vector<2x16xf32>
      %41 = math.tanh %40 : vector<2x16xf32>
      %42 = arith.maximumf %arg11, %41 : vector<2x16xf32>
      scf.yield %42 : vector<2x16xf32>
    }
    %c8_i32_1 = arith.constant 8 : i32
    %c0_2 = arith.constant 0 : index
    %c0_3 = arith.constant 0 : index
    %6 = vector.load %arg7[%c0_2, %c0_3] : memref<16x4xf32, #tpu.memory_space<vmem>>, vector<16x4xf32>
    %cst_4 = arith.constant dense<0.000000e+00> : vector<2x4xf32>
    %7 = tpu.matmul %5, %6, %cst_4 {dimension_numbers = #tpu.dot_dimension_numbers<[1], [0], [0], [1], [0, 0, 1, 1], [], []>} : vector<2x16xf32>, vector<16x4xf32>, vector<2x4xf32> -> vector<2x4xf32>
    %c0_5 = arith.constant 0 : index
    %c0_6 = arith.constant 0 : index
    %8 = vector.load %arg8[%c0_5, %c0_6] : memref<1x4xf32, #tpu.memory_space<vmem>>, vector<1x4xf32>
    %9 = vector.broadcast %8 : vector<1x4xf32> to vector<2x4xf32>
    %10 = arith.addf %7, %9 : vector<2x4xf32>
    %cst_7 = arith.constant dense<0xFF800000> : vector<2xf32>
    %11 = vector.multi_reduction <maximumf>, %10, %cst_7 [1] : vector<2x4xf32> to vector<2xf32>
    %12 = vector.shape_cast %11 : vector<2xf32> to vector<2x1xf32>
    %13 = vector.broadcast %12 : vector<2x1xf32> to vector<2x4xf32>
    %14 = arith.subf %10, %13 : vector<2x4xf32>
    %15 = math.exp %14 : vector<2x4xf32>
    %cst_8 = arith.constant dense<0.000000e+00> : vector<2xf32>
    %16 = vector.multi_reduction <add>, %15, %cst_8 [1] : vector<2x4xf32> to vector<2xf32>
    %17 = vector.shape_cast %16 : vector<2xf32> to vector<2x1xf32>
    %18 = math.log %17 : vector<2x1xf32>
    %19 = arith.addf %12, %18 : vector<2x1xf32>
    %20 = vector.broadcast %19 : vector<2x1xf32> to vector<2x4xf32>
    %21 = arith.subf %10, %20 : vector<2x4xf32>
    %c0_9 = arith.constant 0 : index
    %c0_10 = arith.constant 0 : index
    %22 = vector.load %arg9[%c0_9, %c0_10] : memref<2x4xf32, #tpu.memory_space<vmem>>, vector<2x4xf32>
    tpu.vector_store %arg9[%c0_9, %c0_10], %21 {strides = array<i32>} : memref<2x4xf32, #tpu.memory_space<vmem>>, vector<2x4xf32>,
    return
  }
  func.func @transform_0(%arg0: i32) -> (i32, i32, i32, i32) {
    %c0_i32 = arith.constant 0 : i32
    %c0_i32_0 = arith.constant 0 : i32
    %c0_i32_1 = arith.constant 0 : i32
    %c0_i32_2 = arith.constant 0 : i32
    return %c0_i32, %c0_i32_0, %arg0, %c0_i32_1 : i32, i32, i32, i32
  }
  func.func @transform_1(%arg0: i32) -> (i32, i32, i32) {
    %c0_i32 = arith.constant 0 : i32
    %c0_i32_0 = arith.constant 0 : i32
    %c0_i32_1 = arith.constant 0 : i32
    return %c0_i32, %arg0, %c0_i32_0 : i32, i32, i32
  }
  func.func @transform_2(%arg0: i32) -> (i32, i32) {
    %c0_i32 = arith.constant 0 : i32
    %c0_i32_0 = arith.constant 0 : i32
    %c0_i32_1 = arith.constant 0 : i32
    return %c0_i32, %c0_i32_0 : i32, i32
  }
  func.func @transform_3(%arg0: i32) -> (i32, i32) {
    %c0_i32 = arith.constant 0 : i32
    %c0_i32_0 = arith.constant 0 : i32
    %c0_i32_1 = arith.constant 0 : i32
    return %c0_i32, %c0_i32_0 : i32, i32
  }
  func.func @transform_4(%arg0: i32) -> (i32, i32) {
    %c0_i32 = arith.constant 0 : i32
    %c0_i32_0 = arith.constant 0 : i32
    %c0_i32_1 = arith.constant 0 : i32
    return %c0_i32, %c0_i32_0 : i32, i32
  }
  func.func @transform_5(%arg0: i32) -> (i32, i32) {
    %c0_i32 = arith.constant 0 : i32
    %c0_i32_0 = arith.constant 0 : i32
    %c0_i32_1 = arith.constant 0 : i32
    return %c0_i32, %c0_i32_0 : i32, i32
  }
  func.func @transform_6(%arg0: i32) -> (i32, i32) {
    %c0_i32 = arith.constant 0 : i32
    %c0_i32_0 = arith.constant 0 : i32
    %c0_i32_1 = arith.constant 0 : i32
    return %c0_i32, %c0_i32_0 : i32, i32
  }
  func.func @transform_7(%arg0: i32) -> (i32, i32) {
    %c0_i32 = arith.constant 0 : i32
    %c0_i32_0 = arith.constant 0 : i32
    %c0_i32_1 = arith.constant 0 : i32
    return %c0_i32, %c0_i32_0 : i32, i32
  }
  func.func @transform_8(%arg0: i32) -> (i32, i32) {
    %c0_i32 = arith.constant 0 : i32
    %c0_i32_0 = arith.constant 0 : i32
    return %arg0, %c0_i32 : i32, i32
  }
}

module attributes {stable_mosaic.version = 11 : i64} {
  func.func @_bilstm_kernel(%arg0: i32, %arg1: i32, %arg2: memref<8x2x32xf32, #tpu.memory_space<vmem>>, %arg3: memref<1x32x512xf32, #tpu.memory_space<vmem>>, %arg4: memref<1x128x512xf32, #tpu.memory_space<vmem>>, %arg5: memref<1x1x512xf32, #tpu.memory_space<vmem>>, %arg6: memref<1x8x2x128xf32, #tpu.memory_space<vmem>>, %arg7: memref<8x2x512xf32, #tpu.memory_space<vmem>>, %arg8: memref<2x128xf32, #tpu.memory_space<vmem>>, %arg9: memref<2x128xf32, #tpu.memory_space<vmem>>) attributes {dimension_semantics = [#tpu.dimension_semantics<parallel>, #tpu.dimension_semantics<parallel>], iteration_bounds = array<i64: 2, 1>, scalar_prefetch = 0 : i64, scratch_operands = 3 : i64, tpu.core_type = #tpu.core_type<tc>, window_params = [{transform_indices = @transform_0, window_bounds = array<i64: 8, 2, 32>}, {transform_indices = @transform_1, window_bounds = array<i64: 1, 32, 512>}, {transform_indices = @transform_2, window_bounds = array<i64: 1, 128, 512>}, {transform_indices = @transform_3, window_bounds = array<i64: 1, 1, 512>}, {transform_indices = @transform_4, window_bounds = array<i64: 1, 8, 2, 128>}]} {
    %c0 = arith.constant 0 : index
    %c0_0 = arith.constant 0 : index
    %c0_1 = arith.constant 0 : index
    %0 = vector.load %arg5[%c0, %c0_0, %c0_1] : memref<1x1x512xf32, #tpu.memory_space<vmem>>, vector<1x1x512xf32>
    %1 = vector.shape_cast %0 : vector<1x1x512xf32> to vector<1x512xf32>
    %2 = vector.shape_cast %1 : vector<1x512xf32> to vector<1x512xf32>
    %3 = vector.broadcast %2 : vector<1x512xf32> to vector<2x512xf32>
    %c0_i32 = arith.constant 0 : i32
    %c8_i32 = arith.constant 8 : i32
    %4 = arith.addi %c0_i32, %c8_i32 : i32
    %c1_i32 = arith.constant 1 : i32
    scf.for %arg10 = %c0_i32 to %4 step %c1_i32  : i32 {
      %10 = arith.index_cast %arg10 : i32 to index
      %c0_12 = arith.constant 0 : index
      %c0_13 = arith.constant 0 : index
      %11 = vector.load %arg2[%10, %c0_12, %c0_13] : memref<8x2x32xf32, #tpu.memory_space<vmem>>, vector<1x2x32xf32>
      %12 = vector.shape_cast %11 : vector<1x2x32xf32> to vector<2x32xf32>
      %c0_14 = arith.constant 0 : index
      %c0_15 = arith.constant 0 : index
      %c0_16 = arith.constant 0 : index
      %13 = vector.load %arg3[%c0_14, %c0_15, %c0_16] : memref<1x32x512xf32, #tpu.memory_space<vmem>>, vector<1x32x512xf32>
      %14 = vector.shape_cast %13 : vector<1x32x512xf32> to vector<32x512xf32>
      %cst_17 = arith.constant dense<0.000000e+00> : vector<2x512xf32>
      %15 = tpu.matmul %12, %14, %cst_17 {dimension_numbers = #tpu.dot_dimension_numbers<[1], [0], [0], [1], [0, 0, 1, 1], [], []>} : vector<2x32xf32>, vector<32x512xf32>, vector<2x512xf32> -> vector<2x512xf32>
      %16 = arith.addf %15, %3 : vector<2x512xf32>
      %17 = arith.index_cast %arg10 : i32 to index
      %c0_18 = arith.constant 0 : index
      %c0_19 = arith.constant 0 : index
      %18 = vector.load %arg7[%17, %c0_18, %c0_19] : memref<8x2x512xf32, #tpu.memory_space<vmem>>, vector<1x2x512xf32>
      %19 = vector.shape_cast %18 : vector<1x2x512xf32> to vector<2x512xf32>
      %20 = vector.shape_cast %16 : vector<2x512xf32> to vector<1x2x512xf32>
      tpu.vector_store %arg7[%17, %c0_18, %c0_19], %20 {strides = array<i32>} : memref<8x2x512xf32, #tpu.memory_space<vmem>>, vector<1x2x512xf32>,
    }
    %c8_i32_2 = arith.constant 8 : i32
    %cst = arith.constant 0.000000e+00 : f32
    %5 = vector.broadcast %cst : f32 to vector<2x128xf32>
    %c0_3 = arith.constant 0 : index
    %c0_4 = arith.constant 0 : index
    %6 = vector.load %arg8[%c0_3, %c0_4] : memref<2x128xf32, #tpu.memory_space<vmem>>, vector<2x128xf32>
    tpu.vector_store %arg8[%c0_3, %c0_4], %5 {strides = array<i32>} : memref<2x128xf32, #tpu.memory_space<vmem>>, vector<2x128xf32>,
    %cst_5 = arith.constant 0.000000e+00 : f32
    %7 = vector.broadcast %cst_5 : f32 to vector<2x128xf32>
    %c0_6 = arith.constant 0 : index
    %c0_7 = arith.constant 0 : index
    %8 = vector.load %arg9[%c0_6, %c0_7] : memref<2x128xf32, #tpu.memory_space<vmem>>, vector<2x128xf32>
    tpu.vector_store %arg9[%c0_6, %c0_7], %7 {strides = array<i32>} : memref<2x128xf32, #tpu.memory_space<vmem>>, vector<2x128xf32>,
    %c0_i32_8 = arith.constant 0 : i32
    %c8_i32_9 = arith.constant 8 : i32
    %9 = arith.addi %c0_i32_8, %c8_i32_9 : i32
    %c1_i32_10 = arith.constant 1 : i32
    scf.for %arg10 = %c0_i32_8 to %9 step %c1_i32_10  : i32 {
      %c0_i32_12 = arith.constant 0 : i32
      %10 = arith.cmpi eq, %arg0, %c0_i32_12 : i32
      %c7_i32 = arith.constant 7 : i32
      %11 = arith.subi %c7_i32, %arg10 : i32
      %12 = arith.select %10, %arg10, %11 : i32
      %13 = arith.index_cast %12 : i32 to index
      %c0_13 = arith.constant 0 : index
      %c0_14 = arith.constant 0 : index
      %14 = vector.load %arg7[%13, %c0_13, %c0_14] : memref<8x2x512xf32, #tpu.memory_space<vmem>>, vector<1x2x512xf32>
      %15 = vector.shape_cast %14 : vector<1x2x512xf32> to vector<2x512xf32>
      %c0_15 = arith.constant 0 : index
      %c0_16 = arith.constant 0 : index
      %16 = vector.load %arg8[%c0_15, %c0_16] : memref<2x128xf32, #tpu.memory_space<vmem>>, vector<2x128xf32>
      %c0_17 = arith.constant 0 : index
      %c0_18 = arith.constant 0 : index
      %c0_19 = arith.constant 0 : index
      %17 = vector.load %arg4[%c0_17, %c0_18, %c0_19] : memref<1x128x512xf32, #tpu.memory_space<vmem>>, vector<1x128x512xf32>
      %18 = vector.shape_cast %17 : vector<1x128x512xf32> to vector<128x512xf32>
      %cst_20 = arith.constant dense<0.000000e+00> : vector<2x512xf32>
      %19 = tpu.matmul %16, %18, %cst_20 {dimension_numbers = #tpu.dot_dimension_numbers<[1], [0], [0], [1], [0, 0, 1, 1], [], []>} : vector<2x128xf32>, vector<128x512xf32>, vector<2x512xf32> -> vector<2x512xf32>
      %20 = arith.addf %15, %19 : vector<2x512xf32>
      %21 = vector.extract_strided_slice %20 {offsets = [0, 0], sizes = [2, 128], strides = [1, 1]} : vector<2x512xf32> to vector<2x128xf32>
      %22 = arith.negf %21 : vector<2x128xf32>
      %23 = math.exp %22 : vector<2x128xf32>
      %cst_21 = arith.constant 1.000000e+00 : f32
      %24 = vector.broadcast %cst_21 : f32 to vector<2x128xf32>
      %25 = arith.addf %24, %23 : vector<2x128xf32>
      %26 = arith.divf %24, %25 : vector<2x128xf32>
      %27 = vector.extract_strided_slice %20 {offsets = [0, 128], sizes = [2, 128], strides = [1, 1]} : vector<2x512xf32> to vector<2x128xf32>
      %28 = arith.negf %27 : vector<2x128xf32>
      %29 = math.exp %28 : vector<2x128xf32>
      %cst_22 = arith.constant 1.000000e+00 : f32
      %30 = vector.broadcast %cst_22 : f32 to vector<2x128xf32>
      %31 = arith.addf %30, %29 : vector<2x128xf32>
      %32 = arith.divf %30, %31 : vector<2x128xf32>
      %33 = vector.extract_strided_slice %20 {offsets = [0, 256], sizes = [2, 128], strides = [1, 1]} : vector<2x512xf32> to vector<2x128xf32>
      %34 = math.tanh %33 : vector<2x128xf32>
      %35 = vector.extract_strided_slice %20 {offsets = [0, 384], sizes = [2, 128], strides = [1, 1]} : vector<2x512xf32> to vector<2x128xf32>
      %36 = arith.negf %35 : vector<2x128xf32>
      %37 = math.exp %36 : vector<2x128xf32>
      %cst_23 = arith.constant 1.000000e+00 : f32
      %38 = vector.broadcast %cst_23 : f32 to vector<2x128xf32>
      %39 = arith.addf %38, %37 : vector<2x128xf32>
      %40 = arith.divf %38, %39 : vector<2x128xf32>
      %c0_24 = arith.constant 0 : index
      %c0_25 = arith.constant 0 : index
      %41 = vector.load %arg9[%c0_24, %c0_25] : memref<2x128xf32, #tpu.memory_space<vmem>>, vector<2x128xf32>
      %42 = arith.mulf %32, %41 : vector<2x128xf32>
      %43 = arith.mulf %26, %34 : vector<2x128xf32>
      %44 = arith.addf %42, %43 : vector<2x128xf32>
      %45 = math.tanh %44 : vector<2x128xf32>
      %46 = arith.mulf %40, %45 : vector<2x128xf32>
      %c0_26 = arith.constant 0 : index
      %c0_27 = arith.constant 0 : index
      %47 = vector.load %arg9[%c0_26, %c0_27] : memref<2x128xf32, #tpu.memory_space<vmem>>, vector<2x128xf32>
      tpu.vector_store %arg9[%c0_26, %c0_27], %44 {strides = array<i32>} : memref<2x128xf32, #tpu.memory_space<vmem>>, vector<2x128xf32>,
      %c0_28 = arith.constant 0 : index
      %c0_29 = arith.constant 0 : index
      %48 = vector.load %arg8[%c0_28, %c0_29] : memref<2x128xf32, #tpu.memory_space<vmem>>, vector<2x128xf32>
      tpu.vector_store %arg8[%c0_28, %c0_29], %46 {strides = array<i32>} : memref<2x128xf32, #tpu.memory_space<vmem>>, vector<2x128xf32>,
      %c0_30 = arith.constant 0 : index
      %49 = arith.index_cast %12 : i32 to index
      %c0_31 = arith.constant 0 : index
      %c0_32 = arith.constant 0 : index
      %50 = vector.load %arg6[%c0_30, %49, %c0_31, %c0_32] : memref<1x8x2x128xf32, #tpu.memory_space<vmem>>, vector<1x1x2x128xf32>
      %51 = vector.shape_cast %50 : vector<1x1x2x128xf32> to vector<2x128xf32>
      %52 = vector.shape_cast %46 : vector<2x128xf32> to vector<1x1x2x128xf32>
      tpu.vector_store %arg6[%c0_30, %49, %c0_31, %c0_32], %52 {strides = array<i32>} : memref<1x8x2x128xf32, #tpu.memory_space<vmem>>, vector<1x1x2x128xf32>,
    }
    %c8_i32_11 = arith.constant 8 : i32
    return
  }
  func.func @transform_0(%arg0: i32, %arg1: i32) -> (i32, i32, i32) {
    %c0_i32 = arith.constant 0 : i32
    %c0_i32_0 = arith.constant 0 : i32
    %c0_i32_1 = arith.constant 0 : i32
    return %c0_i32, %arg1, %c0_i32_0 : i32, i32, i32
  }
  func.func @transform_1(%arg0: i32, %arg1: i32) -> (i32, i32, i32) {
    %c0_i32 = arith.constant 0 : i32
    %c0_i32_0 = arith.constant 0 : i32
    %c0_i32_1 = arith.constant 0 : i32
    return %arg0, %c0_i32, %c0_i32_0 : i32, i32, i32
  }
  func.func @transform_2(%arg0: i32, %arg1: i32) -> (i32, i32, i32) {
    %c0_i32 = arith.constant 0 : i32
    %c0_i32_0 = arith.constant 0 : i32
    %c0_i32_1 = arith.constant 0 : i32
    return %arg0, %c0_i32, %c0_i32_0 : i32, i32, i32
  }
  func.func @transform_3(%arg0: i32, %arg1: i32) -> (i32, i32, i32) {
    %c0_i32 = arith.constant 0 : i32
    %c0_i32_0 = arith.constant 0 : i32
    %c0_i32_1 = arith.constant 0 : i32
    return %arg0, %c0_i32, %c0_i32_0 : i32, i32, i32
  }
  func.func @transform_4(%arg0: i32, %arg1: i32) -> (i32, i32, i32, i32) {
    %c0_i32 = arith.constant 0 : i32
    %c0_i32_0 = arith.constant 0 : i32
    %c0_i32_1 = arith.constant 0 : i32
    return %arg0, %c0_i32, %arg1, %c0_i32_0 : i32, i32, i32, i32
  }
}

</mosaic_0001>

<llo_original>
// kernel: rcnn_forward.3
$region0: #{rcnn_forward.3}
  #allocation0 [shape = 'u32[]', space=smem, size = 0x4, offset = 0x4, fixed_abs, tag = 'smem constant byte address 0x4 - core index']
  #allocation1 [shape = 'u32[72,128]{1,0:T(1,128)}', space=vmem, size = 0x9000, scoped, tag = 'internal scratch']
  %s0 = inlined_call_operand.vmem [shape: f32[2,8,2,128], index: 0, kind: input, shape index: {}]
  %s1 = inlined_call_operand.vmem [shape: f32[8,2,32], index: 1, kind: input, shape index: {}]
  %s2 = inlined_call_operand.vmem [shape: f32[128,16], index: 2, kind: input, shape index: {}]
  %s3 = inlined_call_operand.vmem [shape: f32[128,16], index: 3, kind: input, shape index: {}]
  %s4 = inlined_call_operand.vmem [shape: f32[32,16], index: 4, kind: input, shape index: {}]
  %s5 = inlined_call_operand.vmem [shape: f32[1,16], index: 5, kind: input, shape index: {}]
  %s6 = inlined_call_operand.vmem [shape: f32[16,4], index: 6, kind: input, shape index: {}]
  %s7 = inlined_call_operand.vmem [shape: f32[1,4], index: 7, kind: input, shape index: {}]
  %s8 = inlined_call_operand.hbm [shape: f32[2,4], index: 8, kind: output, shape index: {}]
  %s9 = sld [smem:[#allocation0]]
  $region49: #{rcnn_forward.3} parent=0
    _
  %s11 = ssub.s32 1, %s9
  %s12 = scalar_select 0, %s11, %s9
  $region1: #{rcnn_forward.3} parent=0
    #allocation2 [shape = 'u8[1024]{0}', space=vmem, size = 0x400, scoped, tag = 'output window, operand 0, single buffered']
    #allocation3 [shape = 's32[1]{0}', space=sflag, size = 0x4, scoped, tag = 'scoped memory for rcnn_forward.3']
    %13 = vsyncpa [#allocation3], 0
    // Predicated region
    $region2: #{rcnn_forward.3} parent=1 // pred_check
      _
    $region3: #{rcnn_forward.3} parent=1 // pred_check_branch
      %15 = sbr.rel (0) target = $region5
    $region4: #{rcnn_forward.3} parent=1 // pred_region
      _
    $region5: #{rcnn_forward.3} parent=1 // pred_fallthru
      _
    // Predicated region
    $region6: #{rcnn_forward.3} parent=1 // pred_check
      _
    $region7: #{rcnn_forward.3} parent=1 // pred_check_branch
      %17 = sbr.rel (0) target = $region9
    $region8: #{rcnn_forward.3} parent=1 // pred_region
      _
    $region9: #{rcnn_forward.3} parent=1 // pred_fallthru
      _
    // Predicated region
    $region10: #{rcnn_forward.3} parent=1 // pred_check
      _
    $region11: #{rcnn_forward.3} parent=1 // pred_check_branch
      %19 = sbr.rel (0) target = $region13
    $region12: #{rcnn_forward.3} parent=1 // pred_region
      _
    $region13: #{rcnn_forward.3} parent=1 // pred_fallthru
      _
    // Predicated region
    $region14: #{rcnn_forward.3} parent=1 // pred_check
      _
    $region15: #{rcnn_forward.3} parent=1 // pred_check_branch
      %21 = sbr.rel (0) target = $region17
    $region16: #{rcnn_forward.3} parent=1 // pred_region
      _
    $region17: #{rcnn_forward.3} parent=1 // pred_fallthru
      _
    // Predicated region
    $region18: #{rcnn_forward.3} parent=1 // pred_check
      _
    $region19: #{rcnn_forward.3} parent=1 // pred_check_branch
      %23 = sbr.rel (0) target = $region21
    $region20: #{rcnn_forward.3} parent=1 // pred_region
      _
    $region21: #{rcnn_forward.3} parent=1 // pred_fallthru
      _
    // Predicated region
    $region22: #{rcnn_forward.3} parent=1 // pred_check
      _
    $region23: #{rcnn_forward.3} parent=1 // pred_check_branch
      %25 = sbr.rel (0) target = $region25
    $region24: #{rcnn_forward.3} parent=1 // pred_region
      _
    $region25: #{rcnn_forward.3} parent=1 // pred_fallthru
      _
    // Predicated region
    $region26: #{rcnn_forward.3} parent=1 // pred_check
      _
    $region27: #{rcnn_forward.3} parent=1 // pred_check_branch
      %27 = sbr.rel (0) target = $region29
    $region28: #{rcnn_forward.3} parent=1 // pred_region
      _
    $region29: #{rcnn_forward.3} parent=1 // pred_fallthru
      _
    // Predicated region
    $region30: #{rcnn_forward.3} parent=1 // pred_check
      _
    $region31: #{rcnn_forward.3} parent=1 // pred_check_branch
      %29 = sbr.rel (0) target = $region33
    $region32: #{rcnn_forward.3} parent=1 // pred_region
      _
    $region33: #{rcnn_forward.3} parent=1 // pred_fallthru
      _
    %v30 = vld [vmem:[%s5] sm:$0x1]
    %v32 = vperm.slane %v30, 0
    loop: start=0, step=1, limit=8
    $region34: #{rcnn_forward.3} parent=1 // loop_pre_header
      _
    $region35: #{rcnn_forward.3} parent=1 // loop_header
      %s35 = sphi 0, %s39
      %p36 = scmp.ge.s32.totalorder %s35, 8
      %v40 = vphi -inf, %v152
    $region36: #{rcnn_forward.3} parent=1 // loop_header_branch
      %38 = sbr.rel (%p36) target = $region40
    $region37: #{rcnn_forward.3} parent=1 // loop_body
      %s41 = smul.u32 %s35, 2
      %s42 = scalar_lea.vmem %s0, %s41
      %v43 = vld [vmem:[%s42] sm:$0x3]
      %v44 = vld [vmem:[%s2] sm:$0xff]
      %v45 = vld [vmem:[%s2 + $0x8] sm:$0xff]
      %v46 = vld [vmem:[%s2 + $0x10] sm:$0xff]
      %v47 = vld [vmem:[%s2 + $0x18] sm:$0xff]
      %v48 = vld [vmem:[%s2 + $0x20] sm:$0xff]
      %v49 = vld [vmem:[%s2 + $0x28] sm:$0xff]
      %v50 = vld [vmem:[%s2 + $0x30] sm:$0xff]
      %v51 = vld [vmem:[%s2 + $0x38] sm:$0xff]
      %v52 = vld [vmem:[%s2 + $0x40] sm:$0xff]
      %v53 = vld [vmem:[%s2 + $0x48] sm:$0xff]
      %v54 = vld [vmem:[%s2 + $0x50] sm:$0xff]
      %v55 = vld [vmem:[%s2 + $0x58] sm:$0xff]
      %v56 = vld [vmem:[%s2 + $0x60] sm:$0xff]
      %v57 = vld [vmem:[%s2 + $0x68] sm:$0xff]
      %v58 = vld [vmem:[%s2 + $0x70] sm:$0xff]
      %v59 = vld [vmem:[%s2 + $0x78] sm:$0xff]
      %s60 = sadd.s32 %s41, 16
      %s61 = scalar_lea.vmem %s0, %s60
      %v62 = vld [vmem:[%s61] sm:$0x3]
      %v63 = vld [vmem:[%s3] sm:$0xff]
      %v64 = vld [vmem:[%s3 + $0x8] sm:$0xff]
      %v65 = vld [vmem:[%s3 + $0x10] sm:$0xff]
      %v66 = vld [vmem:[%s3 + $0x18] sm:$0xff]
      %v67 = vld [vmem:[%s3 + $0x20] sm:$0xff]
      %v68 = vld [vmem:[%s3 + $0x28] sm:$0xff]
      %v69 = vld [vmem:[%s3 + $0x30] sm:$0xff]
      %v70 = vld [vmem:[%s3 + $0x38] sm:$0xff]
      %v71 = vld [vmem:[%s3 + $0x40] sm:$0xff]
      %v72 = vld [vmem:[%s3 + $0x48] sm:$0xff]
      %v73 = vld [vmem:[%s3 + $0x50] sm:$0xff]
      %v74 = vld [vmem:[%s3 + $0x58] sm:$0xff]
      %v75 = vld [vmem:[%s3 + $0x60] sm:$0xff]
      %v76 = vld [vmem:[%s3 + $0x68] sm:$0xff]
      %v77 = vld [vmem:[%s3 + $0x70] sm:$0xff]
      %v78 = vld [vmem:[%s3 + $0x78] sm:$0xff]
      %79 = vmatpush.msra.mxu0 %v78
      %80 = vmatpush.msra.mxu0 %v77
      %81 = vmatpush.msra.mxu0 %v76
      %82 = vmatpush.msra.mxu0 %v75
      %83 = vmatpush.msra.mxu0 %v74
      %84 = vmatpush.msra.mxu0 %v73
      %85 = vmatpush.msra.mxu0 %v72
      %86 = vmatpush.msra.mxu0 %v71
      %87 = vmatpush.msra.mxu0 %v70
      %88 = vmatpush.msra.mxu0 %v69
      %89 = vmatpush.msra.mxu0 %v68
      %90 = vmatpush.msra.mxu0 %v67
      %91 = vmatpush.msra.mxu0 %v66
      %92 = vmatpush.msra.mxu0 %v65
      %93 = vmatpush.msra.mxu0 %v64
      %94 = vmatpush.msra.mxu0 %v63
      %95 = vmatmul.f32.gmra.mxu0 %v62
      %v96 = vpop.f32.mrf.mxu0
      %v97 = vadd.f32 0.0, %v96
      %98 = vdwg.mxu0
      %99 = vmatpush.msra.mxu0 %v59
      %100 = vmatpush.msra.mxu0 %v58
      %101 = vmatpush.msra.mxu0 %v57
      %102 = vmatpush.msra.mxu0 %v56
      %103 = vmatpush.msra.mxu0 %v55
      %104 = vmatpush.msra.mxu0 %v54
      %105 = vmatpush.msra.mxu0 %v53
      %106 = vmatpush.msra.mxu0 %v52
      %107 = vmatpush.msra.mxu0 %v51
      %108 = vmatpush.msra.mxu0 %v50
      %109 = vmatpush.msra.mxu0 %v49
      %110 = vmatpush.msra.mxu0 %v48
      %111 = vmatpush.msra.mxu0 %v47
      %112 = vmatpush.msra.mxu0 %v46
      %113 = vmatpush.msra.mxu0 %v45
      %114 = vmatpush.msra.mxu0 %v44
      %115 = vmatmul.f32.gmra.mxu0 %v43
      %v116 = vpop.f32.mrf.mxu0
      %v117 = vadd.f32 %v97, %v116
      %118 = vdwg.mxu0
      %s119 = scalar_lea.vmem %s1, %s41
      %v120 = vld [vmem:[%s119] sm:$0x3]
      %v121 = vld [vmem:[%s4] sm:$0xff]
      %v122 = vld [vmem:[%s4 + $0x8] sm:$0xff]
      %v123 = vld [vmem:[%s4 + $0x10] sm:$0xff]
      %v124 = vld [vmem:[%s4 + $0x18] sm:$0xff]
      %vm125 = vcmask 261120
      %v127 = vsel %vm125, %v120, 0
      %129 = vmatpush.msra.mxu0 0.0
      %130 = vmatpush.msra.mxu0 0.0
      %131 = vmatpush.msra.mxu0 0.0
      %132 = vmatpush.msra.mxu0 0.0
      %133 = vmatpush.msra.mxu0 0.0
      %134 = vmatpush.msra.mxu0 0.0
      %135 = vmatpush.msra.mxu0 0.0
      %136 = vmatpush.msra.mxu0 0.0
      %137 = vmatpush.msra.mxu0 0.0
      %138 = vmatpush.msra.mxu0 0.0
      %139 = vmatpush.msra.mxu0 0.0
      %140 = vmatpush.msra.mxu0 0.0
      %141 = vmatpush.msra.mxu0 %v124
      %142 = vmatpush.msra.mxu0 %v123
      %143 = vmatpush.msra.mxu0 %v122
      %144 = vmatpush.msra.mxu0 %v121
      %145 = vmatmul.f32.gmra.mxu0 %v127
      %v146 = vpop.f32.mrf.mxu0
      %v147 = vadd.f32 0.0, %v146
      %148 = vdwg.mxu0
      %v149 = vadd.f32 %v117, %v147
      %v150 = vadd.f32 %v149, %v32
      %v151 = vtanh.pop %v150
      %v152 = vmax.f32 %v40, %v151
    $region38: #{rcnn_forward.3} parent=1 // loop_footer
      %s39 = sadd.s32 1, %s35
    $region39: #{rcnn_forward.3} parent=1 // loop_footer_branch
      %34 = sbr.rel target = $region35
    $region40: #{rcnn_forward.3} parent=1 // loop_exit
      _
    %v153 = vld [vmem:[%s6] sm:$0xff]
    %v154 = vld [vmem:[%s6 + $0x8] sm:$0xff]
    %v155 = vld [vmem:[%s7] sm:$0x1]
    %v157 = vperm.slane %v155, 0
    %vm159 = vcmask 130048
    %v161 = vsel %vm159, %v40, 0
    %163 = vmatpush.msra.mxu0 0.0
    %164 = vmatpush.msra.mxu0 0.0
    %165 = vmatpush.msra.mxu0 0.0
    %166 = vmatpush.msra.mxu0 0.0
    %167 = vmatpush.msra.mxu0 0.0
    %168 = vmatpush.msra.mxu0 0.0
    %169 = vmatpush.msra.mxu0 0.0
    %170 = vmatpush.msra.mxu0 0.0
    %171 = vmatpush.msra.mxu0 0.0
    %172 = vmatpush.msra.mxu0 0.0
    %173 = vmatpush.msra.mxu0 0.0
    %174 = vmatpush.msra.mxu0 0.0
    %175 = vmatpush.msra.mxu0 0.0
    %176 = vmatpush.msra.mxu0 0.0
    %177 = vmatpush.msra.mxu0 %v154
    %178 = vmatpush.msra.mxu0 %v153
    %179 = vmatmul.f32.gmra.mxu0 %v161
    %v180 = vpop.f32.mrf.mxu0
    %v181 = vadd.f32 %v157, %v180
    %182 = vdwg.mxu0
    %vm183 = vcmask 25600
    %v184 = vsel %vm183, %v181, -inf
    %185 = vmax.xlane.f32.xlu0 %v184
    %v186 = vpop.xlane.xlu0 %185
    %v187 = vsub.f32 %v181, %v186
    %v188 = vmul.f32 %v187, 1.442695
    %v189 = vpow.pop %v188
    %v190 = vsel %vm183, %v189, 0.0
    %191 = vadd.xlane.f32.xlu0 %v190
    %v192 = vpop.xlane.xlu0 %191
    %v193 = vlog2.pop %v192
    %v194 = vmul.f32 %v193, 0.6931472
    %v195 = vadd.f32 %v186, %v194
    %v196 = vsub.f32 %v181, %v195
    %197 = vst.msk [vmem:[#allocation2] sm:$0x3] %vm183, %v196
    // Predicated region
    $region41: #{rcnn_forward.3} parent=1 // pred_check
      _
    $region42: #{rcnn_forward.3} parent=1 // pred_check_branch
      %199 = sbr.rel (0) target = $region44
    $region43: #{rcnn_forward.3} parent=1 // pred_region
      %201 = vsyncadd [#allocation3], 0
      %s203 = sshll.u32 [#allocation2], 4
      %s204 = int_to_ptr.vmem [resolvable:$true] %s203
      %s205 = sshll.u32 %s8, 4
      %s206 = int_to_ptr.hbm [resolvable:$true] %s205
      %208 = dma.vmem_to_hbm [thread:$0]  %s204, 32, %s206, [#allocation3]
    $region44: #{rcnn_forward.3} parent=1 // pred_fallthru
      _
    // Predicated region
    $region45: #{rcnn_forward.3} parent=1 // pred_check
      _
    $region46: #{rcnn_forward.3} parent=1 // pred_check_branch
      %210 = sbr.rel (0) target = $region48
    $region47: #{rcnn_forward.3} parent=1 // pred_region
      %212 = dma.done [#allocation3], 32
    $region48: #{rcnn_forward.3} parent=1 // pred_fallthru
      _
    %213 = vsyncpa [#allocation3], 1

// kernel: rcnn_forward.2
$region0: #{rcnn_forward.2}
  #allocation0 [shape = 'u32[]', space=smem, size = 0x4, offset = 0x4, fixed_abs, tag = 'smem constant byte address 0x4 - core index']
  #allocation1 [shape = 'u32[72,128]{1,0:T(1,128)}', space=vmem, size = 0x9000, scoped, tag = 'internal scratch']
  #allocation2 [shape = 'f32[8,2,512]{2,1,0:T(2,128)}', space=vmem, size = 0x8000, scoped, tag = 'scratch operand']
  #allocation3 [shape = 'f32[2,128]{1,0:T(2,128)}', space=vmem, size = 0x400, scoped, tag = 'scratch operand']
  #allocation4 [shape = 'f32[2,128]{1,0:T(2,128)}', space=vmem, size = 0x400, scoped, tag = 'scratch operand']
  %s0 = inlined_call_operand.vmem [shape: f32[8,2,32], index: 0, kind: input, shape index: {}]
  %s1 = inlined_call_operand.vmem [shape: f32[2,32,512], index: 1, kind: input, shape index: {}]
  %s2 = inlined_call_operand.hbm [shape: f32[2,128,512], index: 2, kind: input, shape index: {}]
  %s3 = inlined_call_operand.vmem [shape: f32[2,1,512], index: 3, kind: input, shape index: {}]
  %s4 = inlined_call_operand.vmem [shape: f32[2,8,2,128], index: 4, kind: output, shape index: {}]
  %s5 = sld [smem:[#allocation0]]
  $region67: #{rcnn_forward.2} parent=0
    _
  %s7 = ssub.s32 1, %s5
  %s8 = scalar_select 0, %s7, %s5
  $region1: #{rcnn_forward.2} parent=0
    #allocation5 [shape = 'u8[524288]{0}', space=vmem, size = 0x80000, scoped, tag = 'input window, operand 2']
    #allocation6 [shape = 's32[2]{0}', space=sflag, size = 0x8, scoped, tag = 'scoped memory for rcnn_forward.2']
    %9 = vsyncpa [#allocation6], 0
    %s10 = scalar_lea.sflag [#allocation6], 1
    %11 = vsyncpa %s10, 0
    loop: start=0, step=1, limit=4
    $region2: #{rcnn_forward.2} parent=1 // loop_pre_header
      _
    $region3: #{rcnn_forward.2} parent=1 // loop_header
      %s13 = sphi 0, %s17
      %p14 = scmp.ge.s32.totalorder %s13, 4
      %s20 = sphi 0, %s32
      %s21 = sphi 0, %s28
      %s22 = sphi 0, %s20
      %s23 = sphi 0, %s21
      %s24 = sphi 0, %s22
      %s25 = sphi 0, %s23
      %s35 = sphi 0, %s37
      %s38 = sphi 0, %s35
      %s39 = sphi 0, %s38
      %s55 = sphi 0, %s39
      %s61 = sphi 0, %s63
      %s64 = sphi 0, %s61
      %s65 = sphi 0, %s64
      %s81 = sphi 0, %s65
      %s87 = sphi 0, %s89
      %s90 = sphi 0, %s87
      %s91 = sphi 0, %s90
      %s107 = sphi 0, %s91
      %s113 = sphi 0, %s115
      %s116 = sphi 0, %s113
      %s117 = sphi 0, %s116
      %s133 = sphi 0, %s117
      %s141 = sphi 0, %s143
      %s144 = sphi 0, %s141
      %s145 = sphi 0, %s144
      %s161 = sphi 0, %s145
    $region4: #{rcnn_forward.2} parent=1 // loop_header_branch
      %16 = sbr.rel (%p14) target = $region8
    $region5: #{rcnn_forward.2} parent=1 // loop_body
      %s18 = ssub.s32 %s13, 1
      %s19 = ssub.s32 %s13, 2
      %s26 = sadd.s32 1, %s21
      %p27 = scmp.ge.s32.totalorder %s26, 1
      %s28 = scalar_select %p27, 0, %s26
      %s29 = sadd.s32 1, %s20
      %s30 = scalar_select %p27, %s29, %s20
      %p31 = scmp.ge.s32.totalorder %s30, 2
      %s32 = scalar_select %p31, 0, %s30
      %s33 = ssub.s32 %s21, %s28
      %p34 = scmp.eq.s32.totalorder %s33, 0
      %s36 = sadd.s32 %s35, 1
      %s37 = scalar_select %p34, %s35, %s36
      %p40 = pneg %p34
      %p41 = scmp.eq.s32.totalorder %s13, 1
      %p42 = por %p40, %p41
      %p43 = scmp.ne.s32.totalorder %s35, %s38
      %p44 = scmp.eq.s32.totalorder %s13, 0
      %p45 = por %p43, %p44
      %p46 = scmp.ne.s32.totalorder %s35, %s38
      %p47 = scmp.eq.s32.totalorder %s18, 1
      %p48 = por %p46, %p47
      %p49 = scmp.ne.s32.totalorder %s38, %s39
      %p50 = scmp.eq.s32.totalorder %s18, 0
      %p51 = por %p49, %p50
      %p52 = scmp.ne.s32.totalorder %s38, %s39
      %p53 = scmp.eq.s32.totalorder %s19, 1
      %p54 = por %p52, %p53
      %p56 = scmp.ne.s32.totalorder %s39, %s55
      %p57 = scmp.eq.s32.totalorder %s19, 0
      %p58 = por %p56, %p57
      %s59 = ssub.s32 %s20, %s32
      %p60 = scmp.eq.s32.totalorder %s59, 0
      %s62 = sadd.s32 %s61, 1
      %s63 = scalar_select %p60, %s61, %s62
      %p66 = pneg %p60
      %p67 = scmp.eq.s32.totalorder %s13, 1
      %p68 = por %p66, %p67
      %p69 = scmp.ne.s32.totalorder %s61, %s64
      %p70 = scmp.eq.s32.totalorder %s13, 0
      %p71 = por %p69, %p70
      %p72 = scmp.ne.s32.totalorder %s61, %s64
      %p73 = scmp.eq.s32.totalorder %s18, 1
      %p74 = por %p72, %p73
      %p75 = scmp.ne.s32.totalorder %s64, %s65
      %p76 = scmp.eq.s32.totalorder %s18, 0
      %p77 = por %p75, %p76
      %p78 = scmp.ne.s32.totalorder %s64, %s65
      %p79 = scmp.eq.s32.totalorder %s19, 1
      %p80 = por %p78, %p79
      %p82 = scmp.ne.s32.totalorder %s65, %s81
      %p83 = scmp.eq.s32.totalorder %s19, 0
      %p84 = por %p82, %p83
      %s85 = ssub.s32 %s20, %s32
      %p86 = scmp.eq.s32.totalorder %s85, 0
      %s88 = sadd.s32 %s87, 1
      %s89 = scalar_select %p86, %s87, %s88
      %p92 = pneg %p86
      %p93 = scmp.eq.s32.totalorder %s13, 1
      %p94 = por %p92, %p93
      %p95 = scmp.ne.s32.totalorder %s87, %s90
      %p96 = scmp.eq.s32.totalorder %s13, 0
      %p97 = por %p95, %p96
      %p98 = scmp.ne.s32.totalorder %s87, %s90
      %p99 = scmp.eq.s32.totalorder %s18, 1
      %p100 = por %p98, %p99
      %p101 = scmp.ne.s32.totalorder %s90, %s91
      %p102 = scmp.eq.s32.totalorder %s18, 0
      %p103 = por %p101, %p102
      %p104 = scmp.ne.s32.totalorder %s90, %s91
      %p105 = scmp.eq.s32.totalorder %s19, 1
      %p106 = por %p104, %p105
      %p108 = scmp.ne.s32.totalorder %s91, %s107
      %p109 = scmp.eq.s32.totalorder %s19, 0
      %p110 = por %p108, %p109
      %s111 = ssub.s32 %s20, %s32
      %p112 = scmp.eq.s32.totalorder %s111, 0
      %s114 = sadd.s32 %s113, 1
      %s115 = scalar_select %p112, %s113, %s114
      %p118 = pneg %p112
      %p119 = scmp.eq.s32.totalorder %s13, 1
      %p120 = por %p118, %p119
      %p121 = scmp.ne.s32.totalorder %s113, %s116
      %p122 = scmp.eq.s32.totalorder %s13, 0
      %p123 = por %p121, %p122
      %p124 = scmp.ne.s32.totalorder %s113, %s116
      %p125 = scmp.eq.s32.totalorder %s18, 1
      %p126 = por %p124, %p125
      %p127 = scmp.ne.s32.totalorder %s116, %s117
      %p128 = scmp.eq.s32.totalorder %s18, 0
      %p129 = por %p127, %p128
      %p130 = scmp.ne.s32.totalorder %s116, %s117
      %p131 = scmp.eq.s32.totalorder %s19, 1
      %p132 = por %p130, %p131
      %p134 = scmp.ne.s32.totalorder %s117, %s133
      %p135 = scmp.eq.s32.totalorder %s19, 0
      %p136 = por %p134, %p135
      %s137 = ssub.s32 %s20, %s32
      %s138 = ssub.s32 %s21, %s28
      %s139 = sor.u32 %s137, %s138
      %p140 = scmp.eq.s32.totalorder %s139, 0
      %s142 = sadd.s32 %s141, 1
      %s143 = scalar_select %p140, %s141, %s142
      %p146 = pneg %p140
      %p147 = scmp.eq.s32.totalorder %s13, 1
      %p148 = por %p146, %p147
      %p149 = scmp.ne.s32.totalorder %s141, %s144
      %p150 = scmp.eq.s32.totalorder %s13, 0
      %p151 = por %p149, %p150
      %p152 = scmp.ne.s32.totalorder %s141, %s144
      %p153 = scmp.eq.s32.totalorder %s18, 1
      %p154 = por %p152, %p153
      %p155 = scmp.ne.s32.totalorder %s144, %s145
      %p156 = scmp.eq.s32.totalorder %s18, 0
      %p157 = por %p155, %p156
      %p158 = scmp.ne.s32.totalorder %s144, %s145
      %p159 = scmp.eq.s32.totalorder %s19, 1
      %p160 = por %p158, %p159
      %p162 = scmp.ne.s32.totalorder %s145, %s161
      %p163 = scmp.eq.s32.totalorder %s19, 0
      %p164 = por %p162, %p163
      %p165 = scmp.le.s32.totalorder 1, %s13
      %p166 = scmp.lt.s32.totalorder %s13, 3
      %p167 = pnand %p165, %p166
      %p168 = pneg %p167
      // Predicated region
      $region9: #{rcnn_forward.2} parent=5 // pred_check
        _
      $region10: #{rcnn_forward.2} parent=5 // pred_check_branch
        %170 = sbr.rel (%p167) target = $region12
      $region11: #{rcnn_forward.2} parent=5 // pred_region
        %s171 = ssub.s32 %s13, 1
        // Predicated region
        $region13: #{rcnn_forward.2} parent=11 // pred_check
          %p172 = pneg %p51
        $region14: #{rcnn_forward.2} parent=11 // pred_check_branch
          %174 = sbr.rel (%p172) target = $region16
        $region15: #{rcnn_forward.2} parent=11 // pred_region
          %p175 = scmp.lt.s32.totalorder %s23, 0
          %s176 = scalar_select %p175, %s23, 0
          %s177 = smul.addr %s176, 2
          %s178 = scalar_lea.vmem %s0, %s177
        $region16: #{rcnn_forward.2} parent=11 // pred_fallthru
          _
      $region12: #{rcnn_forward.2} parent=5 // pred_fallthru
        _
      %p179 = scmp.lt.s32.totalorder %s13, 2
      // Predicated region
      $region17: #{rcnn_forward.2} parent=5 // pred_check
        %p180 = pneg %p179
      $region18: #{rcnn_forward.2} parent=5 // pred_check_branch
        %182 = sbr.rel (%p180) target = $region20
      $region19: #{rcnn_forward.2} parent=5 // pred_region
        // Predicated region
        $region21: #{rcnn_forward.2} parent=19 // pred_check
          %p183 = pneg %p71
        $region22: #{rcnn_forward.2} parent=19 // pred_check_branch
          %185 = sbr.rel (%p183) target = $region24
        $region23: #{rcnn_forward.2} parent=19 // pred_region
          %p186 = scmp.lt.s32.totalorder %s20, 1
          %s187 = scalar_select %p186, %s20, 1
          %s188 = smul.addr %s187, 16
          %s189 = smul.addr %s188, 8
          %s190 = scalar_lea.vmem %s1, %s189
        $region24: #{rcnn_forward.2} parent=19 // pred_fallthru
          _
        // Predicated region
        $region25: #{rcnn_forward.2} parent=19 // pred_check
          %p191 = pneg %p97
        $region26: #{rcnn_forward.2} parent=19 // pred_check_branch
          %193 = sbr.rel (%p191) target = $region28
        $region27: #{rcnn_forward.2} parent=19 // pred_region
          %s194 = sand.u32 %s87, 1
          %s195 = scalar_lea.sflag [#allocation6], %s194
          %s196 = sand.u32 %s87, 1
          %s197 = smul.addr %s196, 512
          %s198 = scalar_lea.vmem [#allocation5], %s197
          %200 = vsyncadd %s195, 0
          %s201 = smul.addr %s20, 64
          %s202 = smul.addr %s201, 8
          %s203 = scalar_lea.hbm %s2, %s202
          %s204 = sshll.u32 %s203, 4
          %s205 = int_to_ptr.hbm [resolvable:$true] %s204
          %s206 = sshll.u32 %s198, 4
          %s207 = int_to_ptr.vmem [resolvable:$true] %s206
          %212 = dma.hbm_to_vmem [thread:$0]  %s205, 8192, %s207, %s195, 512, 512, 32
        $region28: #{rcnn_forward.2} parent=19 // pred_fallthru
          _
        // Predicated region
        $region29: #{rcnn_forward.2} parent=19 // pred_check
          %p213 = pneg %p123
        $region30: #{rcnn_forward.2} parent=19 // pred_check_branch
          %215 = sbr.rel (%p213) target = $region32
        $region31: #{rcnn_forward.2} parent=19 // pred_region
          %p216 = scmp.lt.s32.totalorder %s20, 1
          %s217 = scalar_select %p216, %s20, 1
          %s218 = smul.addr %s217, 4
          %s219 = scalar_lea.vmem %s3, %s218
        $region32: #{rcnn_forward.2} parent=19 // pred_fallthru
          _
      $region20: #{rcnn_forward.2} parent=5 // pred_fallthru
        _
      %p220 = scmp.le.s32.totalorder 1, %s13
      %p221 = scmp.lt.s32.totalorder %s13, 3
      %p222 = pnand %p220, %p221
      %p223 = pneg %p222
      // Predicated region
      $region33: #{rcnn_forward.2} parent=5 // pred_check
        _
      $region34: #{rcnn_forward.2} parent=5 // pred_check_branch
        %225 = sbr.rel (%p222) target = $region36
      $region35: #{rcnn_forward.2} parent=5 // pred_region
        %s226 = ssub.s32 %s13, 1
        %s227 = sand.u32 %s90, 1
        %s228 = scalar_lea.sflag [#allocation6], %s227
        %s229 = sand.u32 %s90, 1
        %s230 = smul.addr %s229, 512
        %s231 = scalar_lea.vmem [#allocation5], %s230
        // Predicated region
        $region37: #{rcnn_forward.2} parent=35 // pred_check
          %p232 = pneg %p103
        $region38: #{rcnn_forward.2} parent=35 // pred_check_branch
          %234 = sbr.rel (%p232) target = $region40
        $region39: #{rcnn_forward.2} parent=35 // pred_region
          %236 = dma.done %s228, 8192
        $region40: #{rcnn_forward.2} parent=35 // pred_fallthru
          _
        %p237 = scmp.lt.s32.totalorder %s23, 0
        %s238 = scalar_select %p237, %s23, 0
        %s239 = smul.addr %s238, 2
        %s240 = scalar_lea.vmem %s0, %s239
        %p241 = pneg %p51
        %p242 = pneg %p48
        %p243 = scmp.lt.s32.totalorder %s22, 1
        %s244 = scalar_select %p243, %s22, 1
        %s245 = smul.addr %s244, 16
        %s246 = smul.addr %s245, 8
        %s247 = scalar_lea.vmem %s1, %s246
        %p248 = pneg %p77
        %p249 = pneg %p74
        %s250 = sand.u32 %s90, 1
        %s251 = scalar_lea.sflag [#allocation6], %s250
        %s252 = sand.u32 %s90, 1
        %s253 = smul.addr %s252, 512
        %s254 = scalar_lea.vmem [#allocation5], %s253
        %p255 = pneg %p103
        %p256 = pneg %p100
        %p257 = scmp.lt.s32.totalorder %s22, 1
        %s258 = scalar_select %p257, %s22, 1
        %s259 = smul.addr %s258, 4
        %s260 = scalar_lea.vmem %s3, %s259
        %p261 = pneg %p129
        %p262 = pneg %p126
        %p263 = pneg %p157
        %p264 = pneg %p154
        %p265 = scmp.lt.s32.totalorder %s22, 1
        %s266 = scalar_select %p265, %s22, 1
        %p267 = scmp.lt.s32.totalorder %s23, 0
        %s268 = scalar_select %p267, %s23, 0
        %s269 = smul.addr %s266, 8
        %s270 = sadd.s32 %s268, %s269
        %s271 = smul.addr %s270, 2
        %s272 = scalar_lea.vmem %s4, %s271
        %p273 = scmp.lt.s32.totalorder %s23, 0
        %s274 = scalar_select %p273, %s23, 0
        %s275 = smul.addr %s274, 2
        %s276 = scalar_lea.vmem %s0, %s275
        %p277 = scmp.lt.s32.totalorder %s22, 1
        %s278 = scalar_select %p277, %s22, 1
        %s279 = smul.addr %s278, 16
        %s280 = smul.addr %s279, 8
        %s281 = scalar_lea.vmem %s1, %s280
        %p282 = scmp.lt.s32.totalorder %s22, 1
        %s283 = scalar_select %p282, %s22, 1
        %s284 = smul.addr %s283, 4
        %s285 = scalar_lea.vmem %s3, %s284
        %p286 = scmp.lt.s32.totalorder %s22, 1
        %s287 = scalar_select %p286, %s22, 1
        %p288 = scmp.lt.s32.totalorder %s23, 0
        %s289 = scalar_select %p288, %s23, 0
        %s290 = smul.addr %s287, 8
        %s291 = sadd.s32 %s289, %s290
        %s292 = smul.addr %s291, 2
        %s293 = scalar_lea.vmem %s4, %s292
        %v294 = vld [vmem:[%s285] sm:$0xf]
        %v296 = vperm.slane %v294, 0
        %v297 = vperm.slane %v294, 1
        %v298 = vperm.slane %v294, 2
        %v299 = vperm.slane %v294, 3
        loop: start=0, step=1, limit=8
        $region41: #{rcnn_forward.2} parent=35 // loop_pre_header
          _
        $region42: #{rcnn_forward.2} parent=35 // loop_header
          %s305 = sphi 0, %s309
          %p306 = scmp.ge.s32.totalorder %s305, 8
        $region43: #{rcnn_forward.2} parent=35 // loop_header_branch
          %308 = sbr.rel (%p306) target = $region47
        $region44: #{rcnn_forward.2} parent=35 // loop_body
          %s310 = smul.u32 %s305, 2
          %s311 = scalar_lea.vmem %s276, %s310
          %v312 = vld [vmem:[%s311] sm:$0x3]
          %v313 = vld [vmem:[%s281] sm:$0xff]
          %v314 = vld [vmem:[%s281 + $0x8] sm:$0xff]
          %v315 = vld [vmem:[%s281 + $0x10] sm:$0xff]
          %v316 = vld [vmem:[%s281 + $0x18] sm:$0xff]
          %v317 = vld [vmem:[%s281 + $0x20] sm:$0xff]
          %v318 = vld [vmem:[%s281 + $0x28] sm:$0xff]
          %v319 = vld [vmem:[%s281 + $0x30] sm:$0xff]
          %v320 = vld [vmem:[%s281 + $0x38] sm:$0xff]
          %v321 = vld [vmem:[%s281 + $0x40] sm:$0xff]
          %v322 = vld [vmem:[%s281 + $0x48] sm:$0xff]
          %v323 = vld [vmem:[%s281 + $0x50] sm:$0xff]
          %v324 = vld [vmem:[%s281 + $0x58] sm:$0xff]
          %v325 = vld [vmem:[%s281 + $0x60] sm:$0xff]
          %v326 = vld [vmem:[%s281 + $0x68] sm:$0xff]
          %v327 = vld [vmem:[%s281 + $0x70] sm:$0xff]
          %v328 = vld [vmem:[%s281 + $0x78] sm:$0xff]
          %vm329 = vcmask 261120
          %v331 = vsel %vm329, %v312, 0
          %333 = vmatpush.msra.mxu0 0.0
          %334 = vmatpush.msra.mxu0 0.0
          %335 = vmatpush.msra.mxu0 0.0
          %336 = vmatpush.msra.mxu0 0.0
          %337 = vmatpush.msra.mxu0 0.0
          %338 = vmatpush.msra.mxu0 0.0
          %339 = vmatpush.msra.mxu0 0.0
          %340 = vmatpush.msra.mxu0 0.0
          %341 = vmatpush.msra.mxu0 0.0
          %342 = vmatpush.msra.mxu0 0.0
          %343 = vmatpush.msra.mxu0 0.0
          %344 = vmatpush.msra.mxu0 0.0
          %345 = vmatpush.msra.mxu0 %v325
          %346 = vmatpush.msra.mxu0 %v321
          %347 = vmatpush.msra.mxu0 %v317
          %348 = vmatpush.msra.mxu0 %v313
          %349 = vmatmul.f32.gmra.mxu0 %v331
          %v350 = vpop.f32.mrf.mxu0
          %v351 = vadd.f32 %v296, %v350
          %352 = vdwg.mxu0
          %353 = vmatpush.msra.mxu0 0.0
          %354 = vmatpush.msra.mxu0 0.0
          %355 = vmatpush.msra.mxu0 0.0
          %356 = vmatpush.msra.mxu0 0.0
          %357 = vmatpush.msra.mxu0 0.0
          %358 = vmatpush.msra.mxu0 0.0
          %359 = vmatpush.msra.mxu0 0.0
          %360 = vmatpush.msra.mxu0 0.0
          %361 = vmatpush.msra.mxu0 0.0
          %362 = vmatpush.msra.mxu0 0.0
          %363 = vmatpush.msra.mxu0 0.0
          %364 = vmatpush.msra.mxu0 0.0
          %365 = vmatpush.msra.mxu0 %v326
          %366 = vmatpush.msra.mxu0 %v322
          %367 = vmatpush.msra.mxu0 %v318
          %368 = vmatpush.msra.mxu0 %v314
          %369 = vmatmul.f32.gmra.mxu0 %v331
          %v370 = vpop.f32.mrf.mxu0
          %v371 = vadd.f32 %v297, %v370
          %372 = vdwg.mxu0
          %373 = vmatpush.msra.mxu0 0.0
          %374 = vmatpush.msra.mxu0 0.0
          %375 = vmatpush.msra.mxu0 0.0
          %376 = vmatpush.msra.mxu0 0.0
          %377 = vmatpush.msra.mxu0 0.0
          %378 = vmatpush.msra.mxu0 0.0
          %379 = vmatpush.msra.mxu0 0.0
          %380 = vmatpush.msra.mxu0 0.0
          %381 = vmatpush.msra.mxu0 0.0
          %382 = vmatpush.msra.mxu0 0.0
          %383 = vmatpush.msra.mxu0 0.0
          %384 = vmatpush.msra.mxu0 0.0
          %385 = vmatpush.msra.mxu0 %v327
          %386 = vmatpush.msra.mxu0 %v323
          %387 = vmatpush.msra.mxu0 %v319
          %388 = vmatpush.msra.mxu0 %v315
          %389 = vmatmul.f32.gmra.mxu0 %v331
          %v390 = vpop.f32.mrf.mxu0
          %v391 = vadd.f32 %v298, %v390
          %392 = vdwg.mxu0
          %393 = vmatpush.msra.mxu0 0.0
          %394 = vmatpush.msra.mxu0 0.0
          %395 = vmatpush.msra.mxu0 0.0
          %396 = vmatpush.msra.mxu0 0.0
          %397 = vmatpush.msra.mxu0 0.0
          %398 = vmatpush.msra.mxu0 0.0
          %399 = vmatpush.msra.mxu0 0.0
          %400 = vmatpush.msra.mxu0 0.0
          %401 = vmatpush.msra.mxu0 0.0
          %402 = vmatpush.msra.mxu0 0.0
          %403 = vmatpush.msra.mxu0 0.0
          %404 = vmatpush.msra.mxu0 0.0
          %405 = vmatpush.msra.mxu0 %v328
          %406 = vmatpush.msra.mxu0 %v324
          %407 = vmatpush.msra.mxu0 %v320
          %408 = vmatpush.msra.mxu0 %v316
          %409 = vmatmul.f32.gmra.mxu0 %v331
          %v410 = vpop.f32.mrf.mxu0
          %v411 = vadd.f32 %v299, %v410
          %412 = vdwg.mxu0
          %v417 = vrot.slane %v371, 6
          %v418 = vrot.slane %v391, 4
          %v419 = vrot.slane %v411, 2
          %vm420 = vcmask 1041408
          %v421 = vsel %vm420, %v351, %v417
          %vm422 = vcmask 1045508
          %v423 = vsel %vm422, %v418, %v419
          %vm424 = vcmask 1043456
          %v425 = vsel %vm424, %v421, %v423
          %s427 = smul.u32 %s305, 4
          %s428 = smul.addr %s427, 2
          %s429 = scalar_lea.vmem [#allocation2], %s428
          %430 = vst [vmem:[%s429] sm:$0xff] %v425
        $region45: #{rcnn_forward.2} parent=35 // loop_footer
          %s309 = sadd.s32 1, %s305
        $region46: #{rcnn_forward.2} parent=35 // loop_footer_branch
          %304 = sbr.rel target = $region42
        $region47: #{rcnn_forward.2} parent=35 // loop_exit
          _
        %431 = vst [vmem:[#allocation3] sm:$0x3] 0.0
        %432 = vst [vmem:[#allocation4] sm:$0x3] 0.0
        loop: start=0, step=1, limit=8
        $region48: #{rcnn_forward.2} parent=35 // loop_pre_header
          _
        $region49: #{rcnn_forward.2} parent=35 // loop_header
          %s434 = sphi 0, %s438
          %p435 = scmp.ge.s32.totalorder %s434, 8
        $region50: #{rcnn_forward.2} parent=35 // loop_header_branch
          %437 = sbr.rel (%p435) target = $region54
        $region51: #{rcnn_forward.2} parent=35 // loop_body
          %p439 = scmp.eq.s32.totalorder %s22, 0
          %s440 = ssub.s32 7, %s434
          %s441 = scalar_select %p439, %s434, %s440
          %s442 = smul.u32 %s441, 4
          %s443 = smul.addr %s442, 2
          %s444 = scalar_lea.vmem [#allocation2], %s443
          %v445 = vld [vmem:[%s444] sm:$0xff]
          %v446 = vld [vmem:[#allocation3] sm:$0x3]
          %v447 = vld [vmem:[%s231] sm:$0xff]
          %v448 = vld [vmem:[%s231 + $0x8] sm:$0xff]
          %v449 = vld [vmem:[%s231 + $0x10] sm:$0xff]
          %v450 = vld [vmem:[%s231 + $0x18] sm:$0xff]
          %v451 = vld [vmem:[%s231 + $0x20] sm:$0xff]
          %v452 = vld [vmem:[%s231 + $0x28] sm:$0xff]
          %v453 = vld [vmem:[%s231 + $0x30] sm:$0xff]
          %v454 = vld [vmem:[%s231 + $0x38] sm:$0xff]
          %v455 = vld [vmem:[%s231 + $0x40] sm:$0xff]
          %v456 = vld [vmem:[%s231 + $0x48] sm:$0xff]
          %v457 = vld [vmem:[%s231 + $0x50] sm:$0xff]
          %v458 = vld [vmem:[%s231 + $0x58] sm:$0xff]
          %v459 = vld [vmem:[%s231 + $0x60] sm:$0xff]
          %v460 = vld [vmem:[%s231 + $0x68] sm:$0xff]
          %v461 = vld [vmem:[%s231 + $0x70] sm:$0xff]
          %v462 = vld [vmem:[%s231 + $0x78] sm:$0xff]
          %v463 = vld [vmem:[%s231 + $0x80] sm:$0xff]
          %v464 = vld [vmem:[%s231 + $0x88] sm:$0xff]
          %v465 = vld [vmem:[%s231 + $0x90] sm:$0xff]
          %v466 = vld [vmem:[%s231 + $0x98] sm:$0xff]
          %v467 = vld [vmem:[%s231 + $0xa0] sm:$0xff]
          %v468 = vld [vmem:[%s231 + $0xa8] sm:$0xff]
          %v469 = vld [vmem:[%s231 + $0xb0] sm:$0xff]
          %v470 = vld [vmem:[%s231 + $0xb8] sm:$0xff]
          %v471 = vld [vmem:[%s231 + $0xc0] sm:$0xff]
          %v472 = vld [vmem:[%s231 + $0xc8] sm:$0xff]
          %v473 = vld [vmem:[%s231 + $0xd0] sm:$0xff]
          %v474 = vld [vmem:[%s231 + $0xd8] sm:$0xff]
          %v475 = vld [vmem:[%s231 + $0xe0] sm:$0xff]
          %v476 = vld [vmem:[%s231 + $0xe8] sm:$0xff]
          %v477 = vld [vmem:[%s231 + $0xf0] sm:$0xff]
          %v478 = vld [vmem:[%s231 + $0xf8] sm:$0xff]
          %v479 = vld [vmem:[%s231 + $0x100] sm:$0xff]
          %v480 = vld [vmem:[%s231 + $0x108] sm:$0xff]
          %v481 = vld [vmem:[%s231 + $0x110] sm:$0xff]
          %v482 = vld [vmem:[%s231 + $0x118] sm:$0xff]
          %v483 = vld [vmem:[%s231 + $0x120] sm:$0xff]
          %v484 = vld [vmem:[%s231 + $0x128] sm:$0xff]
          %v485 = vld [vmem:[%s231 + $0x130] sm:$0xff]
          %v486 = vld [vmem:[%s231 + $0x138] sm:$0xff]
          %v487 = vld [vmem:[%s231 + $0x140] sm:$0xff]
          %v488 = vld [vmem:[%s231 + $0x148] sm:$0xff]
          %v489 = vld [vmem:[%s231 + $0x150] sm:$0xff]
          %v490 = vld [vmem:[%s231 + $0x158] sm:$0xff]
          %v491 = vld [vmem:[%s231 + $0x160] sm:$0xff]
          %v492 = vld [vmem:[%s231 + $0x168] sm:$0xff]
          %v493 = vld [vmem:[%s231 + $0x170] sm:$0xff]
          %v494 = vld [vmem:[%s231 + $0x178] sm:$0xff]
          %v495 = vld [vmem:[%s231 + $0x180] sm:$0xff]
          %v496 = vld [vmem:[%s231 + $0x188] sm:$0xff]
          %v497 = vld [vmem:[%s231 + $0x190] sm:$0xff]
          %v498 = vld [vmem:[%s231 + $0x198] sm:$0xff]
          %v499 = vld [vmem:[%s231 + $0x1a0] sm:$0xff]
          %v500 = vld [vmem:[%s231 + $0x1a8] sm:$0xff]
          %v501 = vld [vmem:[%s231 + $0x1b0] sm:$0xff]
          %v502 = vld [vmem:[%s231 + $0x1b8] sm:$0xff]
          %v503 = vld [vmem:[%s231 + $0x1c0] sm:$0xff]
          %v504 = vld [vmem:[%s231 + $0x1c8] sm:$0xff]
          %v505 = vld [vmem:[%s231 + $0x1d0] sm:$0xff]
          %v506 = vld [vmem:[%s231 + $0x1d8] sm:$0xff]
          %v507 = vld [vmem:[%s231 + $0x1e0] sm:$0xff]
          %v508 = vld [vmem:[%s231 + $0x1e8] sm:$0xff]
          %v509 = vld [vmem:[%s231 + $0x1f0] sm:$0xff]
          %v510 = vld [vmem:[%s231 + $0x1f8] sm:$0xff]
          %511 = vmatpush.msra.mxu0 %v507
          %512 = vmatpush.msra.mxu0 %v503
          %513 = vmatpush.msra.mxu0 %v499
          %514 = vmatpush.msra.mxu0 %v495
          %515 = vmatpush.msra.mxu0 %v491
          %516 = vmatpush.msra.mxu0 %v487
          %517 = vmatpush.msra.mxu0 %v483
          %518 = vmatpush.msra.mxu0 %v479
          %519 = vmatpush.msra.mxu0 %v475
          %520 = vmatpush.msra.mxu0 %v471
          %521 = vmatpush.msra.mxu0 %v467
          %522 = vmatpush.msra.mxu0 %v463
          %523 = vmatpush.msra.mxu0 %v459
          %524 = vmatpush.msra.mxu0 %v455
          %525 = vmatpush.msra.mxu0 %v451
          %526 = vmatpush.msra.mxu0 %v447
          %527 = vmatmul.f32.gmra.mxu0 %v446
          %v528 = vpop.f32.mrf.mxu0
          %v529 = vadd.f32 0.0, %v528
          %530 = vdwg.mxu0
          %531 = vmatpush.msra.mxu0 %v508
          %532 = vmatpush.msra.mxu0 %v504
          %533 = vmatpush.msra.mxu0 %v500
          %534 = vmatpush.msra.mxu0 %v496
          %535 = vmatpush.msra.mxu0 %v492
          %536 = vmatpush.msra.mxu0 %v488
          %537 = vmatpush.msra.mxu0 %v484
          %538 = vmatpush.msra.mxu0 %v480
          %539 = vmatpush.msra.mxu0 %v476
          %540 = vmatpush.msra.mxu0 %v472
          %541 = vmatpush.msra.mxu0 %v468
          %542 = vmatpush.msra.mxu0 %v464
          %543 = vmatpush.msra.mxu0 %v460
          %544 = vmatpush.msra.mxu0 %v456
          %545 = vmatpush.msra.mxu0 %v452
          %546 = vmatpush.msra.mxu0 %v448
          %547 = vmatmul.f32.gmra.mxu0 %v446
          %v548 = vpop.f32.mrf.mxu0
          %v549 = vadd.f32 0.0, %v548
          %550 = vdwg.mxu0
          %551 = vmatpush.msra.mxu0 %v509
          %552 = vmatpush.msra.mxu0 %v505
          %553 = vmatpush.msra.mxu0 %v501
          %554 = vmatpush.msra.mxu0 %v497
          %555 = vmatpush.msra.mxu0 %v493
          %556 = vmatpush.msra.mxu0 %v489
          %557 = vmatpush.msra.mxu0 %v485
          %558 = vmatpush.msra.mxu0 %v481
          %559 = vmatpush.msra.mxu0 %v477
          %560 = vmatpush.msra.mxu0 %v473
          %561 = vmatpush.msra.mxu0 %v469
          %562 = vmatpush.msra.mxu0 %v465
          %563 = vmatpush.msra.mxu0 %v461
          %564 = vmatpush.msra.mxu0 %v457
          %565 = vmatpush.msra.mxu0 %v453
          %566 = vmatpush.msra.mxu0 %v449
          %567 = vmatmul.f32.gmra.mxu0 %v446
          %v568 = vpop.f32.mrf.mxu0
          %v569 = vadd.f32 0.0, %v568
          %570 = vdwg.mxu0
          %571 = vmatpush.msra.mxu0 %v510
          %572 = vmatpush.msra.mxu0 %v506
          %573 = vmatpush.msra.mxu0 %v502
          %574 = vmatpush.msra.mxu0 %v498
          %575 = vmatpush.msra.mxu0 %v494
          %576 = vmatpush.msra.mxu0 %v490
          %577 = vmatpush.msra.mxu0 %v486
          %578 = vmatpush.msra.mxu0 %v482
          %579 = vmatpush.msra.mxu0 %v478
          %580 = vmatpush.msra.mxu0 %v474
          %581 = vmatpush.msra.mxu0 %v470
          %582 = vmatpush.msra.mxu0 %v466
          %583 = vmatpush.msra.mxu0 %v462
          %584 = vmatpush.msra.mxu0 %v458
          %585 = vmatpush.msra.mxu0 %v454
          %586 = vmatpush.msra.mxu0 %v450
          %587 = vmatmul.f32.gmra.mxu0 %v446
          %v588 = vpop.f32.mrf.mxu0
          %v589 = vadd.f32 0.0, %v588
          %590 = vdwg.mxu0
          %v595 = vrot.slane %v549, 6
          %v596 = vrot.slane %v569, 4
          %v597 = vrot.slane %v589, 2
          %vm598 = vcmask 1041408
          %v599 = vsel %vm598, %v529, %v595
          %vm600 = vcmask 1045508
          %v601 = vsel %vm600, %v596, %v597
          %vm602 = vcmask 1043456
          %v603 = vsel %vm602, %v599, %v601
          %v605 = vadd.f32 %v445, %v603
          %v606 = vxor.u32 %v605, 2147483648
          %v607 = vmul.f32 %v606, 1.442695
          %v608 = vpow.pop %v607
          %v609 = vadd.f32 %v608, 1.0
          %v610 = vrcp.pop %v609
          %v611 = vmul.f32 %v609, %v610
          %v612 = vsub.f32 1.0, %v611
          %v613 = vmul.f32 %v610, %v612
          %v614 = vadd.f32 %v610, %v613
          %vm615 = vweird.f32 %v609
          %vm616 = vweird.f32 %v610
          %vm617 = vmor %vm615, %vm616
          %v618 = vsel %vm617, %v610, %v614
          %v619 = vand.u32 2147483647, %v609
          %vm620 = vcmp.eq.f32.partialorder %v619, 8.507059e+37
          %v621 = vand.u32 %v609, 2147483648
          %v622 = vor.u32 1.1754944e-38, %v621
          %v623 = vsel %vm620, %v622, %v618
          %v624 = vmul.f32 1.0, %v623
          %v626 = vrot.slane %v605, 2
          %v628 = vxor.u32 %v626, 2147483648
          %v629 = vmul.f32 %v628, 1.442695
          %v630 = vpow.pop %v629
          %v631 = vadd.f32 %v630, 1.0
          %v632 = vrcp.pop %v631
          %v633 = vmul.f32 %v631, %v632
          %v634 = vsub.f32 1.0, %v633
          %v635 = vmul.f32 %v632, %v634
          %v636 = vadd.f32 %v632, %v635
          %vm637 = vweird.f32 %v631
          %vm638 = vweird.f32 %v632
          %vm639 = vmor %vm637, %vm638
          %v640 = vsel %vm639, %v632, %v636
          %v641 = vand.u32 2147483647, %v631
          %vm642 = vcmp.eq.f32.partialorder %v641, 8.507059e+37
          %v643 = vand.u32 %v631, 2147483648
          %v644 = vor.u32 1.1754944e-38, %v643
          %v645 = vsel %vm642, %v644, %v640
          %v646 = vmul.f32 1.0, %v645
          %v647 = vrot.slane %v605, 4
          %v649 = vtanh.pop %v647
          %v650 = vrot.slane %v605, 6
          %v652 = vxor.u32 %v650, 2147483648
          %v653 = vmul.f32 %v652, 1.442695
          %v654 = vpow.pop %v653
          %v655 = vadd.f32 %v654, 1.0
          %v656 = vrcp.pop %v655
          %v657 = vmul.f32 %v655, %v656
          %v658 = vsub.f32 1.0, %v657
          %v659 = vmul.f32 %v656, %v658
          %v660 = vadd.f32 %v656, %v659
          %vm661 = vweird.f32 %v655
          %vm662 = vweird.f32 %v656
          %vm663 = vmor %vm661, %vm662
          %v664 = vsel %vm663, %v656, %v660
          %v665 = vand.u32 2147483647, %v655
          %vm666 = vcmp.eq.f32.partialorder %v665, 8.507059e+37
          %v667 = vand.u32 %v655, 2147483648
          %v668 = vor.u32 1.1754944e-38, %v667
          %v669 = vsel %vm666, %v668, %v664
          %v670 = vmul.f32 1.0, %v669
          %v671 = vld [vmem:[#allocation4] sm:$0x3]
          %v672 = vmul.f32 %v646, %v671
          %v673 = vmul.f32 %v624, %v649
          %v674 = vadd.f32 %v672, %v673
          %v675 = vtanh.pop %v674
          %v676 = vmul.f32 %v670, %v675
          %677 = vst [vmem:[#allocation4] sm:$0x3] %v674
          %678 = vst [vmem:[#allocation3] sm:$0x3] %v676
          %s679 = smul.u32 %s441, 2
          %s680 = scalar_lea.vmem %s293, %s679
          %681 = vst [vmem:[%s680] sm:$0x3] %v676
        $region52: #{rcnn_forward.2} parent=35 // loop_footer
          %s438 = sadd.s32 1, %s434
        $region53: #{rcnn_forward.2} parent=35 // loop_footer_branch
          %433 = sbr.rel target = $region49
        $region54: #{rcnn_forward.2} parent=35 // loop_exit
          _
        %p682 = scmp.lt.s32.totalorder %s22, 1
        %s683 = scalar_select %p682, %s22, 1
        %p684 = scmp.lt.s32.totalorder %s23, 0
        %s685 = scalar_select %p684, %s23, 0
        %s686 = smul.addr %s683, 8
        %s687 = sadd.s32 %s685, %s686
        %s688 = smul.addr %s687, 2
        %s689 = scalar_lea.vmem %s4, %s688
        // Predicated region
        $region55: #{rcnn_forward.2} parent=35 // pred_check
          %p690 = pneg %p154
        $region56: #{rcnn_forward.2} parent=35 // pred_check_branch
          %692 = sbr.rel (%p690) target = $region58
        $region57: #{rcnn_forward.2} parent=35 // pred_region
          _
        $region58: #{rcnn_forward.2} parent=35 // pred_fallthru
          _
      $region36: #{rcnn_forward.2} parent=5 // pred_fallthru
        _
      %p693 = scmp.le.s32.totalorder 2, %s13
      // Predicated region
      $region59: #{rcnn_forward.2} parent=5 // pred_check
        %p694 = pneg %p693
      $region60: #{rcnn_forward.2} parent=5 // pred_check_branch
        %696 = sbr.rel (%p694) target = $region62
      $region61: #{rcnn_forward.2} parent=5 // pred_region
        %s697 = ssub.s32 %s13, 2
        // Predicated region
        $region63: #{rcnn_forward.2} parent=61 // pred_check
          %p698 = pneg %p160
        $region64: #{rcnn_forward.2} parent=61 // pred_check_branch
          %700 = sbr.rel (%p698) target = $region66
        $region65: #{rcnn_forward.2} parent=61 // pred_region
          %p701 = scmp.lt.s32.totalorder %s24, 1
          %s702 = scalar_select %p701, %s24, 1
          %p703 = scmp.lt.s32.totalorder %s25, 0
          %s704 = scalar_select %p703, %s25, 0
          %s705 = smul.addr %s702, 8
          %s706 = sadd.s32 %s704, %s705
          %s707 = smul.addr %s706, 2
          %s708 = scalar_lea.vmem %s4, %s707
        $region66: #{rcnn_forward.2} parent=61 // pred_fallthru
          _
      $region62: #{rcnn_forward.2} parent=5 // pred_fallthru
        _
    $region6: #{rcnn_forward.2} parent=1 // loop_footer
      %s17 = sadd.s32 1, %s13
    $region7: #{rcnn_forward.2} parent=1 // loop_footer_branch
      %12 = sbr.rel target = $region3
    $region8: #{rcnn_forward.2} parent=1 // loop_exit
      _
    %709 = vsyncpa [#allocation6], 1
    %s710 = scalar_lea.sflag [#allocation6], 1
    %711 = vsyncpa %s710, 1

</llo_original>
